<compile_context>
chip_gen: v5e
topology: v5e:2x2
jax: 0.10.0
libtpu: 0.0.40
codegen_flags: <defaults>
</compile_context>

<pallas_src>
import functools
import math

import jax
import jax.numpy as jnp
from jax.experimental import pallas as pl
from jax.experimental.pallas import tpu as pltpu


def _round_up(x, m):
    return ((x + m - 1) // m) * m


# ---------------------------------------------------------------------------
# Fused encoder kernel builder.
# ---------------------------------------------------------------------------
def _build_encoder_kernel(*, T, Bp, H, num_dirs, layout):
    G = num_dirs * H          # per-gate width (both directions interleaved)
    GW = 4 * G                # full gate row width
    n_lstm = len(layout["lstm"])
    f32, bf16 = jnp.float32, jnp.bfloat16

    def kernel(x_ref, w_ref, b_ref, out_ref, xproj_ref, yf_ref, yb_ref):
        # Lane mask selecting forward-direction gate columns (built once):
        # inside every per-gate block of width G, lanes [0:H) are forward.
        if num_dirs == 2:
            lane = jax.lax.broadcasted_iota(jnp.int32, (Bp, GW), 1)
            fwd_mask = (lane % G) < H

        h_last = None
        for li in range(n_lstm):
            lay = layout["lstm"][li]
            wih_off, in_dim = lay["wih"]
            whh_off = lay["whh"]
            b_g = b_ref[lay["b"]:lay["b"] + 1, 0:GW]            # (1, GW)

            # ---- hoisted input projection for all T timesteps (one/two MXU
            #      matmuls per layer), result parked in VMEM scratch ----
            if li == 0:
                w_ih = w_ref[wih_off:wih_off + in_dim, 0:GW]
                xproj_ref[...] = (
                    jnp.dot(x_ref[...], w_ih, preferred_element_type=f32)
                    + b_g)
            else:
                w_top = w_ref[wih_off:wih_off + H, 0:GW]
                proj = jnp.dot(yf_ref[...].astype(bf16), w_top,
                               preferred_element_type=f32)
                if num_dirs == 2:
                    w_bot = w_ref[wih_off + H:wih_off + 2 * H, 0:GW]
                    proj = proj + jnp.dot(yb_ref[...].astype(bf16), w_bot,
                                          preferred_element_type=f32)
                xproj_ref[...] = proj + b_g

            w_hh = w_ref[whh_off:whh_off + G, 0:GW]             # (G, GW) bf16

            h = jnp.zeros((Bp, G), f32)
            c = jnp.zeros((Bp, G), f32)
            need_seq = (li + 1 < n_lstm)
            last_layer = (li + 1 == n_lstm)
            h_b_at_last_t = None

            # Static unrolled time loop; forward step s and backward step
            # T-1-s share one GW-lane gate matmul against block-diag W_hh.
            for s in range(T):
                xp = xproj_ref[pl.ds(s * Bp, Bp), :]
                if num_dirs == 2:
                    xp_rev = xproj_ref[pl.ds((T - 1 - s) * Bp, Bp), :]
                    gx = jnp.where(fwd_mask, xp, xp_rev)
                else:
                    gx = xp
                gates = gx + jnp.dot(h.astype(bf16), w_hh,
                                     preferred_element_type=f32)
                sg = jax.nn.sigmoid(gates[:, 0:3 * G])          # [ i | f | o ]
                gg = jnp.tanh(gates[:, 3 * G:4 * G])            # [ g ]
                c = sg[:, G:2 * G] * c + sg[:, 0:G] * gg
                h = sg[:, 2 * G:3 * G] * jnp.tanh(c)
                if need_seq:
                    # Sequence output feeds the next layer (time-aligned).
                    yf_ref[pl.ds(s * Bp, Bp), :] = h[:, 0:H]
                    if num_dirs == 2:
                        yb_ref[pl.ds((T - 1 - s) * Bp, Bp), :] = h[:, H:G]
                if last_layer and num_dirs == 2 and s == 0:
                    h_b_at_last_t = h[:, H:G]   # bwd hidden at time T-1

            if last_layer:
                if num_dirs == 2:
                    # PyTorch output[:, -1, :] == [h_fwd(T-1) | h_bwd(T-1)].
                    h_last = jnp.concatenate([h[:, 0:H], h_b_at_last_t],
                                             axis=-1)
                else:
                    h_last = h

        # ---- dense MLP on the last-timestep features (Linear + ReLU) ----
        act = h_last
        for lay in layout["dense"]:
            w_off, w_rows, w_cols = lay["w"]
            w = w_ref[w_off:w_off + w_rows, 0:w_cols]
            b = b_ref[lay["b"]:lay["b"] + 1, 0:w_cols]
            act = jnp.maximum(
                jnp.dot(act.astype(bf16), w, preferred_element_type=f32) + b,
                0.0)

        # ---- fused mu/std heads (raw linear output, matches fc_mu / fc_std;
        #      columns lane-padded to a 128-multiple for a dense store) ----
        hw_off, hw_rows, hw_cols = layout["heads"]["w"]
        w = w_ref[hw_off:hw_off + hw_rows, 0:hw_cols]
        b = b_ref[layout["heads"]["b"]:layout["heads"]["b"] + 1, 0:hw_cols]
        out_ref[...] = jnp.dot(act.astype(bf16), w,
                               preferred_element_type=f32) + b

    return kernel


# ---------------------------------------------------------------------------
# Deterministic parameter construction (PyTorch shapes), pre-packed into one
# bf16 weight slab + one f32 bias slab with a static layout table.
# ---------------------------------------------------------------------------
def init_encoder_params(key, *, pose_dim, latent_dim, rnn_layer_count,
                        rnn_layer_size, rnn_bidirectional, dense_layer_sizes):
    H = rnn_layer_size
    num_dirs = 2 if rnn_bidirectional else 1
    G = num_dirs * H
    GW = 4 * G
    k_lstm = 1.0 / math.sqrt(H)
    gate_perm = (0, 1, 3, 2)  # PyTorch column order [i,f,g,o] -> packed [i,f,o,g]

    def uniform(k, shape, a):
        return jax.random.uniform(k, shape, jnp.float32, -a, a)

    def pack_cols(mats):      # mats: per-direction, each (rows, 4H)
        cols = []
        for gsrc in gate_perm:
            for d in range(num_dirs):
                cols.append(mats[d][:, gsrc * H:(gsrc + 1) * H])
        return jnp.concatenate(cols, axis=1)                    # (rows, GW)

    lstm_params = []
    for layer in range(rnn_layer_count):
        in_dim = pose_dim if layer == 0 else G
        wihs, whhs, bs = [], [], []
        for _ in range(num_dirs):
            key, k1, k2, k3, k4 = jax.random.split(key, 5)
            wihs.append(uniform(k1, (in_dim, 4 * H), k_lstm))   # weight_ih.T
            whhs.append(uniform(k2, (H, 4 * H), k_lstm))        # weight_hh.T
            bs.append(uniform(k3, (1, 4 * H), k_lstm)
                      + uniform(k4, (1, 4 * H), k_lstm))        # b_ih + b_hh
        w_ih = pack_cols(wihs)                                  # (in_dim, GW)
        b = pack_cols(bs)                                       # (1, GW)
        # Block-diagonal hidden->gate weights with the same column packing so
        # one (Bp, G) state drives both directions in a single matmul.
        w_hh = jnp.zeros((G, GW), jnp.float32)
        for gi, gsrc in enumerate(gate_perm):
            for d in range(num_dirs):
                w_hh = w_hh.at[
                    d * H:(d + 1) * H,
                    gi * G + d * H:gi * G + (d + 1) * H].set(
                        whhs[d][:, gsrc * H:(gsrc + 1) * H])
        lstm_params.append((w_ih, w_hh, b))

    dense_params = []
    prev = G
    for size in dense_layer_sizes:
        key, k1, k2 = jax.random.split(key, 3)
        a = 1.0 / math.sqrt(prev)
        dense_params.append((uniform(k1, (prev, size), a),
                             uniform(k2, (1, size), a)))
        prev = size

    key, k1, k2, k3, k4 = jax.random.split(key, 5)
    a = 1.0 / math.sqrt(prev)
    w_heads = jnp.concatenate([uniform(k1, (prev, latent_dim), a),
                               uniform(k3, (prev, latent_dim), a)], axis=1)
    b_heads = jnp.concatenate([uniform(k2, (1, latent_dim), a),
                               uniform(k4, (1, latent_dim), a)], axis=1)

    # Lane-pad the fused heads to a 128-multiple -> unmasked lane-dense store.
    head_cols = _round_up(2 * latent_dim, 128)
    w_heads = jnp.pad(w_heads, ((0, 0), (0, head_cols - 2 * latent_dim)))
    b_heads = jnp.pad(b_heads, ((0, 0), (0, head_cols - 2 * latent_dim)))

    # ---- pack everything into two slabs + static layout metadata ----
    slab_w = _round_up(max([GW, head_cols] + list(dense_layer_sizes)), 128)
    w_blocks, b_blocks = [], []
    layout = {"lstm": [], "dense": [], "heads": {}}

    def add_w(mat):
        off = sum(m.shape[0] for m in w_blocks)
        rows = _round_up(mat.shape[0], 16)      # bf16 sublane-pair alignment
        w_blocks.append(jnp.pad(mat, ((0, rows - mat.shape[0]),
                                      (0, slab_w - mat.shape[1]))))
        return off

    def add_b(vec):
        row = len(b_blocks)
        b_blocks.append(jnp.pad(vec, ((0, 0), (0, slab_w - vec.shape[1]))))
        return row

    for w_ih, w_hh, b in lstm_params:
        layout["lstm"].append({"wih": (add_w(w_ih), w_ih.shape[0]),
                               "whh": add_w(w_hh),
                               "b": add_b(b)})
    for w, b in dense_params:
        layout["dense"].append({"w": (add_w(w), w.shape[0], w.shape[1]),
                                "b": add_b(b)})
    layout["heads"] = {"w": (add_w(w_heads), w_heads.shape[0], head_cols),
                       "b": add_b(b_heads)}

    w_slab = jnp.concatenate(w_blocks, axis=0).astype(jnp.bfloat16)
    b_slab = jnp.concatenate(b_blocks, axis=0)
    b_slab = jnp.pad(b_slab, ((0, _round_up(b_slab.shape[0], 8)
                               - b_slab.shape[0]), (0, 0)))

    meta = {"H": H, "num_dirs": num_dirs, "latent_dim": latent_dim,
            "head_cols": head_cols}
    return w_slab, b_slab, layout, meta


# ---------------------------------------------------------------------------
# Forward pass (matches Encoder.forward: returns (mu, std); std is the raw
# linear output, exactly like the reference).
# ---------------------------------------------------------------------------
def encoder_forward(w_slab, b_slab, x, *, layout, meta):
    """x: (B, T, pose_dim), batch-first like nn.LSTM(batch_first=True)."""
    B, T, _ = x.shape
    H = meta["H"]
    num_dirs = meta["num_dirs"]
    G = num_dirs * H
    GW = 4 * G
    latent_dim = meta["latent_dim"]

    # Pad batch to a full sublane tile; padded rows dropped after the kernel.
    Bp = _round_up(B, 8)
    x_p = jnp.pad(x.astype(jnp.float32), ((0, Bp - B), (0, 0), (0, 0)))
    # Time-major rows, bf16 (halves the x DMA and removes an in-kernel cast).
    x2d = jnp.transpose(x_p, (1, 0, 2)).reshape(T * Bp, -1).astype(jnp.bfloat16)

    kernel = _build_encoder_kernel(T=T, Bp=Bp, H=H, num_dirs=num_dirs,
                                   layout=layout)

    vmem = functools.partial(pl.BlockSpec, memory_space=pltpu.MemorySpace.VMEM)
    out = pl.pallas_call(
        kernel,
        out_shape=jax.ShapeDtypeStruct((Bp, meta["head_cols"]), jnp.float32),
        in_specs=[vmem(), vmem(), vmem()],
        out_specs=vmem(),
        scratch_shapes=[pltpu.VMEM((T * Bp, GW), jnp.float32),   # x @ W_ih
                        pltpu.VMEM((T * Bp, H), jnp.float32),    # fwd seq out
                        pltpu.VMEM((T * Bp, H), jnp.float32)],   # bwd seq out
        # TODO(synk): for large batches on v7x, add a "parallel" batch grid
        # axis so both TensorCores are used; at B=2 one invocation is optimal.
    )(x2d, w_slab, b_slab)

    mu = out[:B, 0:latent_dim]
    std = out[:B, latent_dim:2 * latent_dim]
    return mu, std


if __name__ == "__main__":
    # Small config consistent with the module's constructor.
    B = 2
    sequence_length = 8
    pose_dim = 16
    latent_dim = 8
    rnn_layer_count = 2
    rnn_layer_size = 32
    rnn_bidirectional = True
    dense_layer_sizes = [32, 16]

    key = jax.random.PRNGKey(0)
    key_p, key_x = jax.random.split(key)

    w_slab, b_slab, layout, meta = init_encoder_params(
        key_p,
        pose_dim=pose_dim,
        latent_dim=latent_dim,
        rnn_layer_count=rnn_layer_count,
        rnn_layer_size=rnn_layer_size,
        rnn_bidirectional=rnn_bidirectional,
        dense_layer_sizes=dense_layer_sizes,
    )

    x = jax.random.normal(key_x, (B, sequence_length, pose_dim), jnp.float32)

    fwd = jax.jit(functools.partial(encoder_forward, layout=layout, meta=meta))
    mu, std = fwd(w_slab, b_slab, x)
    mu = jax.block_until_ready(mu)
    std = jax.block_until_ready(std)

    assert mu.shape == (B, latent_dim) and std.shape == (B, latent_dim)
    assert bool(jnp.all(jnp.isfinite(mu))) and bool(jnp.all(jnp.isfinite(std)))
    print("KERNEL_OK")
</pallas_src>

<mosaic_0001>
module attributes {stable_mosaic.version = 11 : i64} {
  func.func @kernel(%arg0: memref<64x16xbf16, #tpu.memory_space<vmem>>, %arg1: memref<320x256xbf16, #tpu.memory_space<vmem>>, %arg2: memref<8x256xf32, #tpu.memory_space<vmem>>, %arg3: memref<8x128xf32, #tpu.memory_space<vmem>>, %arg4: memref<64x256xf32, #tpu.memory_space<vmem>>, %arg5: memref<64x32xf32, #tpu.memory_space<vmem>>, %arg6: memref<64x32xf32, #tpu.memory_space<vmem>>) attributes {dimension_semantics = [], scalar_prefetch = 0 : i64, scratch_operands = 3 : i64, tpu.core_type = #tpu.core_type<tc>} {
    %0 = tpu.iota {dimensions = array<i32: 1>} : vector<8x256xi32>
    %c64_i32 = arith.constant 64 : i32
    %c0_i32 = arith.constant 0 : i32
    %1 = arith.cmpi eq, %c64_i32, %c0_i32 : i32
    %c1_i32 = arith.constant 1 : i32
    %2 = arith.select %1, %c1_i32, %c64_i32 : i32
    %3 = vector.broadcast %2 : i32 to vector<8x256xi32>
    %4 = arith.remsi %0, %3 : vector<8x256xi32>
    %c0_i32_0 = arith.constant 0 : i32
    %5 = vector.broadcast %c0_i32_0 : i32 to vector<8x256xi32>
    %6 = arith.cmpi ne, %4, %5 : vector<8x256xi32>
    %c0_i32_1 = arith.constant 0 : i32
    %7 = vector.broadcast %c0_i32_1 : i32 to vector<8x256xi32>
    %8 = arith.cmpi slt, %4, %7 : vector<8x256xi32>
    %c0_i32_2 = arith.constant 0 : i32
    %9 = arith.cmpi slt, %2, %c0_i32_2 : i32
    %10 = vector.broadcast %9 : i1 to vector<8x256xi1>
    %11 = vector.broadcast %10 : vector<8x256xi1> to vector<8x256xi1>
    %12 = arith.xori %8, %11 : vector<8x256xi1>
    %13 = arith.andi %12, %6 : vector<8x256xi1>
    %14 = vector.broadcast %2 : i32 to vector<8x256xi32>
    %15 = arith.addi %4, %14 : vector<8x256xi32>
    %16 = arith.select %13, %15, %4 : vector<8x256xi1>, vector<8x256xi32>
    %c32_i32 = arith.constant 32 : i32
    %17 = vector.broadcast %c32_i32 : i32 to vector<8x256xi32>
    %18 = arith.cmpi slt, %16, %17 : vector<8x256xi32>
    %c0 = arith.constant 0 : index
    %c0_3 = arith.constant 0 : index
    %19 = vector.load %arg2[%c0, %c0_3] : memref<8x256xf32, #tpu.memory_space<vmem>>, vector<1x256xf32>
    %c0_4 = arith.constant 0 : index
    %c0_5 = arith.constant 0 : index
    %20 = vector.load %arg1[%c0_4, %c0_5] : memref<320x256xbf16, #tpu.memory_space<vmem>>, vector<16x256xbf16>
    %c0_6 = arith.constant 0 : index
    %c0_7 = arith.constant 0 : index
    %21 = vector.load %arg0[%c0_6, %c0_7] : memref<64x16xbf16, #tpu.memory_space<vmem>>, vector<64x16xbf16>
    %cst = arith.constant dense<0.000000e+00> : vector<64x256xf32>
    %22 = tpu.matmul %21, %20, %cst {dimension_numbers = #tpu.dot_dimension_numbers<[1], [0], [0], [1], [0, 0, 1, 1], [], []>} : vector<64x16xbf16>, vector<16x256xbf16>, vector<64x256xf32> -> vector<64x256xf32>
    %23 = vector.broadcast %19 : vector<1x256xf32> to vector<64x256xf32>
    %24 = arith.addf %22, %23 : vector<64x256xf32>
    %c0_8 = arith.constant 0 : index
    %c0_9 = arith.constant 0 : index
    %25 = vector.load %arg4[%c0_8, %c0_9] : memref<64x256xf32, #tpu.memory_space<vmem>>, vector<64x256xf32>
    tpu.vector_store %arg4[%c0_8, %c0_9], %24 {strides = array<i32>} : memref<64x256xf32, #tpu.memory_space<vmem>>, vector<64x256xf32>,
    %c16 = arith.constant 16 : index
    %c0_10 = arith.constant 0 : index
    %26 = vector.load %arg1[%c16, %c0_10] : memref<320x256xbf16, #tpu.memory_space<vmem>>, vector<64x256xbf16>
    %cst_11 = arith.constant 0.000000e+00 : f32
    %27 = vector.broadcast %cst_11 : f32 to vector<8x64xf32>
    %cst_12 = arith.constant 0.000000e+00 : f32
    %28 = vector.broadcast %cst_12 : f32 to vector<8x64xf32>
    %c0_13 = arith.constant 0 : index
    %c0_14 = arith.constant 0 : index
    %29 = vector.load %arg4[%c0_13, %c0_14] : memref<64x256xf32, #tpu.memory_space<vmem>>, vector<8x256xf32>
    %c56 = arith.constant 56 : index
    %c0_15 = arith.constant 0 : index
    %30 = vector.load %arg4[%c56, %c0_15] : memref<64x256xf32, #tpu.memory_space<vmem>>, vector<8x256xf32>
    %31 = arith.select %18, %29, %30 : vector<8x256xi1>, vector<8x256xf32>
    %32 = arith.truncf %27 : vector<8x64xf32> to vector<8x64xbf16>
    %cst_16 = arith.constant dense<0.000000e+00> : vector<8x256xf32>
    %33 = tpu.matmul %32, %26, %cst_16 {dimension_numbers = #tpu.dot_dimension_numbers<[1], [0], [0], [1], [0, 0, 1, 1], [], []>} : vector<8x64xbf16>, vector<64x256xbf16>, vector<8x256xf32> -> vector<8x256xf32>
    %34 = arith.addf %31, %33 : vector<8x256xf32>
    %35 = vector.extract_strided_slice %34 {offsets = [0, 0], sizes = [8, 192], strides = [1, 1]} : vector<8x256xf32> to vector<8x192xf32>
    %36 = arith.negf %35 : vector<8x192xf32>
    %37 = math.exp %36 : vector<8x192xf32>
    %cst_17 = arith.constant 1.000000e+00 : f32
    %38 = vector.broadcast %cst_17 : f32 to vector<8x192xf32>
    %39 = arith.addf %38, %37 : vector<8x192xf32>
    %40 = arith.divf %38, %39 : vector<8x192xf32>
    %41 = vector.extract_strided_slice %34 {offsets = [0, 192], sizes = [8, 64], strides = [1, 1]} : vector<8x256xf32> to vector<8x64xf32>
    %42 = math.tanh %41 : vector<8x64xf32>
    %43 = vector.extract_strided_slice %40 {offsets = [0, 64], sizes = [8, 64], strides = [1, 1]} : vector<8x192xf32> to vector<8x64xf32>
    %44 = arith.mulf %43, %28 : vector<8x64xf32>
    %45 = vector.extract_strided_slice %40 {offsets = [0, 0], sizes = [8, 64], strides = [1, 1]} : vector<8x192xf32> to vector<8x64xf32>
    %46 = arith.mulf %45, %42 : vector<8x64xf32>
    %47 = arith.addf %44, %46 : vector<8x64xf32>
    %48 = vector.extract_strided_slice %40 {offsets = [0, 128], sizes = [8, 64], strides = [1, 1]} : vector<8x192xf32> to vector<8x64xf32>
    %49 = math.tanh %47 : vector<8x64xf32>
    %50 = arith.mulf %48, %49 : vector<8x64xf32>
    %51 = vector.extract_strided_slice %50 {offsets = [0, 0], sizes = [8, 32], strides = [1, 1]} : vector<8x64xf32> to vector<8x32xf32>
    %c0_18 = arith.constant 0 : index
    %c0_19 = arith.constant 0 : index
    %52 = vector.load %arg5[%c0_18, %c0_19] : memref<64x32xf32, #tpu.memory_space<vmem>>, vector<8x32xf32>
    tpu.vector_store %arg5[%c0_18, %c0_19], %51 {strides = array<i32>} : memref<64x32xf32, #tpu.memory_space<vmem>>, vector<8x32xf32>,
    %53 = vector.extract_strided_slice %50 {offsets = [0, 32], sizes = [8, 32], strides = [1, 1]} : vector<8x64xf32> to vector<8x32xf32>
    %c56_20 = arith.constant 56 : index
    %c0_21 = arith.constant 0 : index
    %54 = vector.load %arg6[%c56_20, %c0_21] : memref<64x32xf32, #tpu.memory_space<vmem>>, vector<8x32xf32>
    tpu.vector_store %arg6[%c56_20, %c0_21], %53 {strides = array<i32>} : memref<64x32xf32, #tpu.memory_space<vmem>>, vector<8x32xf32>,
    %c8 = arith.constant 8 : index
    %c0_22 = arith.constant 0 : index
    %55 = vector.load %arg4[%c8, %c0_22] : memref<64x256xf32, #tpu.memory_space<vmem>>, vector<8x256xf32>
    %c48 = arith.constant 48 : index
    %c0_23 = arith.constant 0 : index
    %56 = vector.load %arg4[%c48, %c0_23] : memref<64x256xf32, #tpu.memory_space<vmem>>, vector<8x256xf32>
    %57 = arith.select %18, %55, %56 : vector<8x256xi1>, vector<8x256xf32>
    %58 = arith.truncf %50 : vector<8x64xf32> to vector<8x64xbf16>
    %cst_24 = arith.constant dense<0.000000e+00> : vector<8x256xf32>
    %59 = tpu.matmul %58, %26, %cst_24 {dimension_numbers = #tpu.dot_dimension_numbers<[1], [0], [0], [1], [0, 0, 1, 1], [], []>} : vector<8x64xbf16>, vector<64x256xbf16>, vector<8x256xf32> -> vector<8x256xf32>
    %60 = arith.addf %57, %59 : vector<8x256xf32>
    %61 = vector.extract_strided_slice %60 {offsets = [0, 0], sizes = [8, 192], strides = [1, 1]} : vector<8x256xf32> to vector<8x192xf32>
    %62 = arith.negf %61 : vector<8x192xf32>
    %63 = math.exp %62 : vector<8x192xf32>
    %cst_25 = arith.constant 1.000000e+00 : f32
    %64 = vector.broadcast %cst_25 : f32 to vector<8x192xf32>
    %65 = arith.addf %64, %63 : vector<8x192xf32>
    %66 = arith.divf %64, %65 : vector<8x192xf32>
    %67 = vector.extract_strided_slice %60 {offsets = [0, 192], sizes = [8, 64], strides = [1, 1]} : vector<8x256xf32> to vector<8x64xf32>
    %68 = math.tanh %67 : vector<8x64xf32>
    %69 = vector.extract_strided_slice %66 {offsets = [0, 64], sizes = [8, 64], strides = [1, 1]} : vector<8x192xf32> to vector<8x64xf32>
    %70 = arith.mulf %69, %47 : vector<8x64xf32>
    %71 = vector.extract_strided_slice %66 {offsets = [0, 0], sizes = [8, 64], strides = [1, 1]} : vector<8x192xf32> to vector<8x64xf32>
    %72 = arith.mulf %71, %68 : vector<8x64xf32>
    %73 = arith.addf %70, %72 : vector<8x64xf32>
    %74 = vector.extract_strided_slice %66 {offsets = [0, 128], sizes = [8, 64], strides = [1, 1]} : vector<8x192xf32> to vector<8x64xf32>
    %75 = math.tanh %73 : vector<8x64xf32>
    %76 = arith.mulf %74, %75 : vector<8x64xf32>
    %77 = vector.extract_strided_slice %76 {offsets = [0, 0], sizes = [8, 32], strides = [1, 1]} : vector<8x64xf32> to vector<8x32xf32>
    %c8_26 = arith.constant 8 : index
    %c0_27 = arith.constant 0 : index
    %78 = vector.load %arg5[%c8_26, %c0_27] : memref<64x32xf32, #tpu.memory_space<vmem>>, vector<8x32xf32>
    tpu.vector_store %arg5[%c8_26, %c0_27], %77 {strides = array<i32>} : memref<64x32xf32, #tpu.memory_space<vmem>>, vector<8x32xf32>,
    %79 = vector.extract_strided_slice %76 {offsets = [0, 32], sizes = [8, 32], strides = [1, 1]} : vector<8x64xf32> to vector<8x32xf32>
    %c48_28 = arith.constant 48 : index
    %c0_29 = arith.constant 0 : index
    %80 = vector.load %arg6[%c48_28, %c0_29] : memref<64x32xf32, #tpu.memory_space<vmem>>, vector<8x32xf32>
    tpu.vector_store %arg6[%c48_28, %c0_29], %79 {strides = array<i32>} : memref<64x32xf32, #tpu.memory_space<vmem>>, vector<8x32xf32>,
    %c16_30 = arith.constant 16 : index
    %c0_31 = arith.constant 0 : index
    %81 = vector.load %arg4[%c16_30, %c0_31] : memref<64x256xf32, #tpu.memory_space<vmem>>, vector<8x256xf32>
    %c40 = arith.constant 40 : index
    %c0_32 = arith.constant 0 : index
    %82 = vector.load %arg4[%c40, %c0_32] : memref<64x256xf32, #tpu.memory_space<vmem>>, vector<8x256xf32>
    %83 = arith.select %18, %81, %82 : vector<8x256xi1>, vector<8x256xf32>
    %84 = arith.truncf %76 : vector<8x64xf32> to vector<8x64xbf16>
    %cst_33 = arith.constant dense<0.000000e+00> : vector<8x256xf32>
    %85 = tpu.matmul %84, %26, %cst_33 {dimension_numbers = #tpu.dot_dimension_numbers<[1], [0], [0], [1], [0, 0, 1, 1], [], []>} : vector<8x64xbf16>, vector<64x256xbf16>, vector<8x256xf32> -> vector<8x256xf32>
    %86 = arith.addf %83, %85 : vector<8x256xf32>
    %87 = vector.extract_strided_slice %86 {offsets = [0, 0], sizes = [8, 192], strides = [1, 1]} : vector<8x256xf32> to vector<8x192xf32>
    %88 = arith.negf %87 : vector<8x192xf32>
    %89 = math.exp %88 : vector<8x192xf32>
    %cst_34 = arith.constant 1.000000e+00 : f32
    %90 = vector.broadcast %cst_34 : f32 to vector<8x192xf32>
    %91 = arith.addf %90, %89 : vector<8x192xf32>
    %92 = arith.divf %90, %91 : vector<8x192xf32>
    %93 = vector.extract_strided_slice %86 {offsets = [0, 192], sizes = [8, 64], strides = [1, 1]} : vector<8x256xf32> to vector<8x64xf32>
    %94 = math.tanh %93 : vector<8x64xf32>
    %95 = vector.extract_strided_slice %92 {offsets = [0, 64], sizes = [8, 64], strides = [1, 1]} : vector<8x192xf32> to vector<8x64xf32>
    %96 = arith.mulf %95, %73 : vector<8x64xf32>
    %97 = vector.extract_strided_slice %92 {offsets = [0, 0], sizes = [8, 64], strides = [1, 1]} : vector<8x192xf32> to vector<8x64xf32>
    %98 = arith.mulf %97, %94 : vector<8x64xf32>
    %99 = arith.addf %96, %98 : vector<8x64xf32>
    %100 = vector.extract_strided_slice %92 {offsets = [0, 128], sizes = [8, 64], strides = [1, 1]} : vector<8x192xf32> to vector<8x64xf32>
    %101 = math.tanh %99 : vector<8x64xf32>
    %102 = arith.mulf %100, %101 : vector<8x64xf32>
    %103 = vector.extract_strided_slice %102 {offsets = [0, 0], sizes = [8, 32], strides = [1, 1]} : vector<8x64xf32> to vector<8x32xf32>
    %c16_35 = arith.constant 16 : index
    %c0_36 = arith.constant 0 : index
    %104 = vector.load %arg5[%c16_35, %c0_36] : memref<64x32xf32, #tpu.memory_space<vmem>>, vector<8x32xf32>
    tpu.vector_store %arg5[%c16_35, %c0_36], %103 {strides = array<i32>} : memref<64x32xf32, #tpu.memory_space<vmem>>, vector<8x32xf32>,
    %105 = vector.extract_strided_slice %102 {offsets = [0, 32], sizes = [8, 32], strides = [1, 1]} : vector<8x64xf32> to vector<8x32xf32>
    %c40_37 = arith.constant 40 : index
    %c0_38 = arith.constant 0 : index
    %106 = vector.load %arg6[%c40_37, %c0_38] : memref<64x32xf32, #tpu.memory_space<vmem>>, vector<8x32xf32>
    tpu.vector_store %arg6[%c40_37, %c0_38], %105 {strides = array<i32>} : memref<64x32xf32, #tpu.memory_space<vmem>>, vector<8x32xf32>,
    %c24 = arith.constant 24 : index
    %c0_39 = arith.constant 0 : index
    %107 = vector.load %arg4[%c24, %c0_39] : memref<64x256xf32, #tpu.memory_space<vmem>>, vector<8x256xf32>
    %c32 = arith.constant 32 : index
    %c0_40 = arith.constant 0 : index
    %108 = vector.load %arg4[%c32, %c0_40] : memref<64x256xf32, #tpu.memory_space<vmem>>, vector<8x256xf32>
    %109 = arith.select %18, %107, %108 : vector<8x256xi1>, vector<8x256xf32>
    %110 = arith.truncf %102 : vector<8x64xf32> to vector<8x64xbf16>
    %cst_41 = arith.constant dense<0.000000e+00> : vector<8x256xf32>
    %111 = tpu.matmul %110, %26, %cst_41 {dimension_numbers = #tpu.dot_dimension_numbers<[1], [0], [0], [1], [0, 0, 1, 1], [], []>} : vector<8x64xbf16>, vector<64x256xbf16>, vector<8x256xf32> -> vector<8x256xf32>
    %112 = arith.addf %109, %111 : vector<8x256xf32>
    %113 = vector.extract_strided_slice %112 {offsets = [0, 0], sizes = [8, 192], strides = [1, 1]} : vector<8x256xf32> to vector<8x192xf32>
    %114 = arith.negf %113 : vector<8x192xf32>
    %115 = math.exp %114 : vector<8x192xf32>
    %cst_42 = arith.constant 1.000000e+00 : f32
    %116 = vector.broadcast %cst_42 : f32 to vector<8x192xf32>
    %117 = arith.addf %116, %115 : vector<8x192xf32>
    %118 = arith.divf %116, %117 : vector<8x192xf32>
    %119 = vector.extract_strided_slice %112 {offsets = [0, 192], sizes = [8, 64], strides = [1, 1]} : vector<8x256xf32> to vector<8x64xf32>
    %120 = math.tanh %119 : vector<8x64xf32>
    %121 = vector.extract_strided_slice %118 {offsets = [0, 64], sizes = [8, 64], strides = [1, 1]} : vector<8x192xf32> to vector<8x64xf32>
    %122 = arith.mulf %121, %99 : vector<8x64xf32>
    %123 = vector.extract_strided_slice %118 {offsets = [0, 0], sizes = [8, 64], strides = [1, 1]} : vector<8x192xf32> to vector<8x64xf32>
    %124 = arith.mulf %123, %120 : vector<8x64xf32>
    %125 = arith.addf %122, %124 : vector<8x64xf32>
    %126 = vector.extract_strided_slice %118 {offsets = [0, 128], sizes = [8, 64], strides = [1, 1]} : vector<8x192xf32> to vector<8x64xf32>
    %127 = math.tanh %125 : vector<8x64xf32>
    %128 = arith.mulf %126, %127 : vector<8x64xf32>
    %129 = vector.extract_strided_slice %128 {offsets = [0, 0], sizes = [8, 32], strides = [1, 1]} : vector<8x64xf32> to vector<8x32xf32>
    %c24_43 = arith.constant 24 : index
    %c0_44 = arith.constant 0 : index
    %130 = vector.load %arg5[%c24_43, %c0_44] : memref<64x32xf32, #tpu.memory_space<vmem>>, vector<8x32xf32>
    tpu.vector_store %arg5[%c24_43, %c0_44], %129 {strides = array<i32>} : memref<64x32xf32, #tpu.memory_space<vmem>>, vector<8x32xf32>,
    %131 = vector.extract_strided_slice %128 {offsets = [0, 32], sizes = [8, 32], strides = [1, 1]} : vector<8x64xf32> to vector<8x32xf32>
    %c32_45 = arith.constant 32 : index
    %c0_46 = arith.constant 0 : index
    %132 = vector.load %arg6[%c32_45, %c0_46] : memref<64x32xf32, #tpu.memory_space<vmem>>, vector<8x32xf32>
    tpu.vector_store %arg6[%c32_45, %c0_46], %131 {strides = array<i32>} : memref<64x32xf32, #tpu.memory_space<vmem>>, vector<8x32xf32>,
    %c32_47 = arith.constant 32 : index
    %c0_48 = arith.constant 0 : index
    %133 = vector.load %arg4[%c32_47, %c0_48] : memref<64x256xf32, #tpu.memory_space<vmem>>, vector<8x256xf32>
    %c24_49 = arith.constant 24 : index
    %c0_50 = arith.constant 0 : index
    %134 = vector.load %arg4[%c24_49, %c0_50] : memref<64x256xf32, #tpu.memory_space<vmem>>, vector<8x256xf32>
    %135 = arith.select %18, %133, %134 : vector<8x256xi1>, vector<8x256xf32>
    %136 = arith.truncf %128 : vector<8x64xf32> to vector<8x64xbf16>
    %cst_51 = arith.constant dense<0.000000e+00> : vector<8x256xf32>
    %137 = tpu.matmul %136, %26, %cst_51 {dimension_numbers = #tpu.dot_dimension_numbers<[1], [0], [0], [1], [0, 0, 1, 1], [], []>} : vector<8x64xbf16>, vector<64x256xbf16>, vector<8x256xf32> -> vector<8x256xf32>
    %138 = arith.addf %135, %137 : vector<8x256xf32>
    %139 = vector.extract_strided_slice %138 {offsets = [0, 0], sizes = [8, 192], strides = [1, 1]} : vector<8x256xf32> to vector<8x192xf32>
    %140 = arith.negf %139 : vector<8x192xf32>
    %141 = math.exp %140 : vector<8x192xf32>
    %cst_52 = arith.constant 1.000000e+00 : f32
    %142 = vector.broadcast %cst_52 : f32 to vector<8x192xf32>
    %143 = arith.addf %142, %141 : vector<8x192xf32>
    %144 = arith.divf %142, %143 : vector<8x192xf32>
    %145 = vector.extract_strided_slice %138 {offsets = [0, 192], sizes = [8, 64], strides = [1, 1]} : vector<8x256xf32> to vector<8x64xf32>
    %146 = math.tanh %145 : vector<8x64xf32>
    %147 = vector.extract_strided_slice %144 {offsets = [0, 64], sizes = [8, 64], strides = [1, 1]} : vector<8x192xf32> to vector<8x64xf32>
    %148 = arith.mulf %147, %125 : vector<8x64xf32>
    %149 = vector.extract_strided_slice %144 {offsets = [0, 0], sizes = [8, 64], strides = [1, 1]} : vector<8x192xf32> to vector<8x64xf32>
    %150 = arith.mulf %149, %146 : vector<8x64xf32>
    %151 = arith.addf %148, %150 : vector<8x64xf32>
    %152 = vector.extract_strided_slice %144 {offsets = [0, 128], sizes = [8, 64], strides = [1, 1]} : vector<8x192xf32> to vector<8x64xf32>
    %153 = math.tanh %151 : vector<8x64xf32>
    %154 = arith.mulf %152, %153 : vector<8x64xf32>
    %155 = vector.extract_strided_slice %154 {offsets = [0, 0], sizes = [8, 32], strides = [1, 1]} : vector<8x64xf32> to vector<8x32xf32>
    %c32_53 = arith.constant 32 : index
    %c0_54 = arith.constant 0 : index
    %156 = vector.load %arg5[%c32_53, %c0_54] : memref<64x32xf32, #tpu.memory_space<vmem>>, vector<8x32xf32>
    tpu.vector_store %arg5[%c32_53, %c0_54], %155 {strides = array<i32>} : memref<64x32xf32, #tpu.memory_space<vmem>>, vector<8x32xf32>,
    %157 = vector.extract_strided_slice %154 {offsets = [0, 32], sizes = [8, 32], strides = [1, 1]} : vector<8x64xf32> to vector<8x32xf32>
    %c24_55 = arith.constant 24 : index
    %c0_56 = arith.constant 0 : index
    %158 = vector.load %arg6[%c24_55, %c0_56] : memref<64x32xf32, #tpu.memory_space<vmem>>, vector<8x32xf32>
    tpu.vector_store %arg6[%c24_55, %c0_56], %157 {strides = array<i32>} : memref<64x32xf32, #tpu.memory_space<vmem>>, vector<8x32xf32>,
    %c40_57 = arith.constant 40 : index
    %c0_58 = arith.constant 0 : index
    %159 = vector.load %arg4[%c40_57, %c0_58] : memref<64x256xf32, #tpu.memory_space<vmem>>, vector<8x256xf32>
    %c16_59 = arith.constant 16 : index
    %c0_60 = arith.constant 0 : index
    %160 = vector.load %arg4[%c16_59, %c0_60] : memref<64x256xf32, #tpu.memory_space<vmem>>, vector<8x256xf32>
    %161 = arith.select %18, %159, %160 : vector<8x256xi1>, vector<8x256xf32>
    %162 = arith.truncf %154 : vector<8x64xf32> to vector<8x64xbf16>
    %cst_61 = arith.constant dense<0.000000e+00> : vector<8x256xf32>
    %163 = tpu.matmul %162, %26, %cst_61 {dimension_numbers = #tpu.dot_dimension_numbers<[1], [0], [0], [1], [0, 0, 1, 1], [], []>} : vector<8x64xbf16>, vector<64x256xbf16>, vector<8x256xf32> -> vector<8x256xf32>
    %164 = arith.addf %161, %163 : vector<8x256xf32>
    %165 = vector.extract_strided_slice %164 {offsets = [0, 0], sizes = [8, 192], strides = [1, 1]} : vector<8x256xf32> to vector<8x192xf32>
    %166 = arith.negf %165 : vector<8x192xf32>
    %167 = math.exp %166 : vector<8x192xf32>
    %cst_62 = arith.constant 1.000000e+00 : f32
    %168 = vector.broadcast %cst_62 : f32 to vector<8x192xf32>
    %169 = arith.addf %168, %167 : vector<8x192xf32>
    %170 = arith.divf %168, %169 : vector<8x192xf32>
    %171 = vector.extract_strided_slice %164 {offsets = [0, 192], sizes = [8, 64], strides = [1, 1]} : vector<8x256xf32> to vector<8x64xf32>
    %172 = math.tanh %171 : vector<8x64xf32>
    %173 = vector.extract_strided_slice %170 {offsets = [0, 64], sizes = [8, 64], strides = [1, 1]} : vector<8x192xf32> to vector<8x64xf32>
    %174 = arith.mulf %173, %151 : vector<8x64xf32>
    %175 = vector.extract_strided_slice %170 {offsets = [0, 0], sizes = [8, 64], strides = [1, 1]} : vector<8x192xf32> to vector<8x64xf32>
    %176 = arith.mulf %175, %172 : vector<8x64xf32>
    %177 = arith.addf %174, %176 : vector<8x64xf32>
    %178 = vector.extract_strided_slice %170 {offsets = [0, 128], sizes = [8, 64], strides = [1, 1]} : vector<8x192xf32> to vector<8x64xf32>
    %179 = math.tanh %177 : vector<8x64xf32>
    %180 = arith.mulf %178, %179 : vector<8x64xf32>
    %181 = vector.extract_strided_slice %180 {offsets = [0, 0], sizes = [8, 32], strides = [1, 1]} : vector<8x64xf32> to vector<8x32xf32>
    %c40_63 = arith.constant 40 : index
    %c0_64 = arith.constant 0 : index
    %182 = vector.load %arg5[%c40_63, %c0_64] : memref<64x32xf32, #tpu.memory_space<vmem>>, vector<8x32xf32>
    tpu.vector_store %arg5[%c40_63, %c0_64], %181 {strides = array<i32>} : memref<64x32xf32, #tpu.memory_space<vmem>>, vector<8x32xf32>,
    %183 = vector.extract_strided_slice %180 {offsets = [0, 32], sizes = [8, 32], strides = [1, 1]} : vector<8x64xf32> to vector<8x32xf32>
    %c16_65 = arith.constant 16 : index
    %c0_66 = arith.constant 0 : index
    %184 = vector.load %arg6[%c16_65, %c0_66] : memref<64x32xf32, #tpu.memory_space<vmem>>, vector<8x32xf32>
    tpu.vector_store %arg6[%c16_65, %c0_66], %183 {strides = array<i32>} : memref<64x32xf32, #tpu.memory_space<vmem>>, vector<8x32xf32>,
    %c48_67 = arith.constant 48 : index
    %c0_68 = arith.constant 0 : index
    %185 = vector.load %arg4[%c48_67, %c0_68] : memref<64x256xf32, #tpu.memory_space<vmem>>, vector<8x256xf32>
    %c8_69 = arith.constant 8 : index
    %c0_70 = arith.constant 0 : index
    %186 = vector.load %arg4[%c8_69, %c0_70] : memref<64x256xf32, #tpu.memory_space<vmem>>, vector<8x256xf32>
    %187 = arith.select %18, %185, %186 : vector<8x256xi1>, vector<8x256xf32>
    %188 = arith.truncf %180 : vector<8x64xf32> to vector<8x64xbf16>
    %cst_71 = arith.constant dense<0.000000e+00> : vector<8x256xf32>
    %189 = tpu.matmul %188, %26, %cst_71 {dimension_numbers = #tpu.dot_dimension_numbers<[1], [0], [0], [1], [0, 0, 1, 1], [], []>} : vector<8x64xbf16>, vector<64x256xbf16>, vector<8x256xf32> -> vector<8x256xf32>
    %190 = arith.addf %187, %189 : vector<8x256xf32>
    %191 = vector.extract_strided_slice %190 {offsets = [0, 0], sizes = [8, 192], strides = [1, 1]} : vector<8x256xf32> to vector<8x192xf32>
    %192 = arith.negf %191 : vector<8x192xf32>
    %193 = math.exp %192 : vector<8x192xf32>
    %cst_72 = arith.constant 1.000000e+00 : f32
    %194 = vector.broadcast %cst_72 : f32 to vector<8x192xf32>
    %195 = arith.addf %194, %193 : vector<8x192xf32>
    %196 = arith.divf %194, %195 : vector<8x192xf32>
    %197 = vector.extract_strided_slice %190 {offsets = [0, 192], sizes = [8, 64], strides = [1, 1]} : vector<8x256xf32> to vector<8x64xf32>
    %198 = math.tanh %197 : vector<8x64xf32>
    %199 = vector.extract_strided_slice %196 {offsets = [0, 64], sizes = [8, 64], strides = [1, 1]} : vector<8x192xf32> to vector<8x64xf32>
    %200 = arith.mulf %199, %177 : vector<8x64xf32>
    %201 = vector.extract_strided_slice %196 {offsets = [0, 0], sizes = [8, 64], strides = [1, 1]} : vector<8x192xf32> to vector<8x64xf32>
    %202 = arith.mulf %201, %198 : vector<8x64xf32>
    %203 = arith.addf %200, %202 : vector<8x64xf32>
    %204 = vector.extract_strided_slice %196 {offsets = [0, 128], sizes = [8, 64], strides = [1, 1]} : vector<8x192xf32> to vector<8x64xf32>
    %205 = math.tanh %203 : vector<8x64xf32>
    %206 = arith.mulf %204, %205 : vector<8x64xf32>
    %207 = vector.extract_strided_slice %206 {offsets = [0, 0], sizes = [8, 32], strides = [1, 1]} : vector<8x64xf32> to vector<8x32xf32>
    %c48_73 = arith.constant 48 : index
    %c0_74 = arith.constant 0 : index
    %208 = vector.load %arg5[%c48_73, %c0_74] : memref<64x32xf32, #tpu.memory_space<vmem>>, vector<8x32xf32>
    tpu.vector_store %arg5[%c48_73, %c0_74], %207 {strides = array<i32>} : memref<64x32xf32, #tpu.memory_space<vmem>>, vector<8x32xf32>,
    %209 = vector.extract_strided_slice %206 {offsets = [0, 32], sizes = [8, 32], strides = [1, 1]} : vector<8x64xf32> to vector<8x32xf32>
    %c8_75 = arith.constant 8 : index
    %c0_76 = arith.constant 0 : index
    %210 = vector.load %arg6[%c8_75, %c0_76] : memref<64x32xf32, #tpu.memory_space<vmem>>, vector<8x32xf32>
    tpu.vector_store %arg6[%c8_75, %c0_76], %209 {strides = array<i32>} : memref<64x32xf32, #tpu.memory_space<vmem>>, vector<8x32xf32>,
    %c56_77 = arith.constant 56 : index
    %c0_78 = arith.constant 0 : index
    %211 = vector.load %arg4[%c56_77, %c0_78] : memref<64x256xf32, #tpu.memory_space<vmem>>, vector<8x256xf32>
    %c0_79 = arith.constant 0 : index
    %c0_80 = arith.constant 0 : index
    %212 = vector.load %arg4[%c0_79, %c0_80] : memref<64x256xf32, #tpu.memory_space<vmem>>, vector<8x256xf32>
    %213 = arith.select %18, %211, %212 : vector<8x256xi1>, vector<8x256xf32>
    %214 = arith.truncf %206 : vector<8x64xf32> to vector<8x64xbf16>
    %cst_81 = arith.constant dense<0.000000e+00> : vector<8x256xf32>
    %215 = tpu.matmul %214, %26, %cst_81 {dimension_numbers = #tpu.dot_dimension_numbers<[1], [0], [0], [1], [0, 0, 1, 1], [], []>} : vector<8x64xbf16>, vector<64x256xbf16>, vector<8x256xf32> -> vector<8x256xf32>
    %216 = arith.addf %213, %215 : vector<8x256xf32>
    %217 = vector.extract_strided_slice %216 {offsets = [0, 0], sizes = [8, 192], strides = [1, 1]} : vector<8x256xf32> to vector<8x192xf32>
    %218 = arith.negf %217 : vector<8x192xf32>
    %219 = math.exp %218 : vector<8x192xf32>
    %cst_82 = arith.constant 1.000000e+00 : f32
    %220 = vector.broadcast %cst_82 : f32 to vector<8x192xf32>
    %221 = arith.addf %220, %219 : vector<8x192xf32>
    %222 = arith.divf %220, %221 : vector<8x192xf32>
    %223 = vector.extract_strided_slice %216 {offsets = [0, 192], sizes = [8, 64], strides = [1, 1]} : vector<8x256xf32> to vector<8x64xf32>
    %224 = math.tanh %223 : vector<8x64xf32>
    %225 = vector.extract_strided_slice %222 {offsets = [0, 64], sizes = [8, 64], strides = [1, 1]} : vector<8x192xf32> to vector<8x64xf32>
    %226 = arith.mulf %225, %203 : vector<8x64xf32>
    %227 = vector.extract_strided_slice %222 {offsets = [0, 0], sizes = [8, 64], strides = [1, 1]} : vector<8x192xf32> to vector<8x64xf32>
    %228 = arith.mulf %227, %224 : vector<8x64xf32>
    %229 = arith.addf %226, %228 : vector<8x64xf32>
    %230 = vector.extract_strided_slice %222 {offsets = [0, 128], sizes = [8, 64], strides = [1, 1]} : vector<8x192xf32> to vector<8x64xf32>
    %231 = math.tanh %229 : vector<8x64xf32>
    %232 = arith.mulf %230, %231 : vector<8x64xf32>
    %233 = vector.extract_strided_slice %232 {offsets = [0, 0], sizes = [8, 32], strides = [1, 1]} : vector<8x64xf32> to vector<8x32xf32>
    %c56_83 = arith.constant 56 : index
    %c0_84 = arith.constant 0 : index
    %234 = vector.load %arg5[%c56_83, %c0_84] : memref<64x32xf32, #tpu.memory_space<vmem>>, vector<8x32xf32>
    tpu.vector_store %arg5[%c56_83, %c0_84], %233 {strides = array<i32>} : memref<64x32xf32, #tpu.memory_space<vmem>>, vector<8x32xf32>,
    %235 = vector.extract_strided_slice %232 {offsets = [0, 32], sizes = [8, 32], strides = [1, 1]} : vector<8x64xf32> to vector<8x32xf32>
    %c0_85 = arith.constant 0 : index
    %c0_86 = arith.constant 0 : index
    %236 = vector.load %arg6[%c0_85, %c0_86] : memref<64x32xf32, #tpu.memory_space<vmem>>, vector<8x32xf32>
    tpu.vector_store %arg6[%c0_85, %c0_86], %235 {strides = array<i32>} : memref<64x32xf32, #tpu.memory_space<vmem>>, vector<8x32xf32>,
    %c1 = arith.constant 1 : index
    %c0_87 = arith.constant 0 : index
    %237 = vector.load %arg2[%c1, %c0_87] : memref<8x256xf32, #tpu.memory_space<vmem>>, vector<1x256xf32>
    %c80 = arith.constant 80 : index
    %c0_88 = arith.constant 0 : index
    %238 = vector.load %arg1[%c80, %c0_88] : memref<320x256xbf16, #tpu.memory_space<vmem>>, vector<32x256xbf16>
    %c0_89 = arith.constant 0 : index
    %c0_90 = arith.constant 0 : index
    %239 = vector.load %arg5[%c0_89, %c0_90] : memref<64x32xf32, #tpu.memory_space<vmem>>, vector<64x32xf32>
    %240 = arith.truncf %239 : vector<64x32xf32> to vector<64x32xbf16>
    %cst_91 = arith.constant dense<0.000000e+00> : vector<64x256xf32>
    %241 = tpu.matmul %240, %238, %cst_91 {dimension_numbers = #tpu.dot_dimension_numbers<[1], [0], [0], [1], [0, 0, 1, 1], [], []>} : vector<64x32xbf16>, vector<32x256xbf16>, vector<64x256xf32> -> vector<64x256xf32>
    %c112 = arith.constant 112 : index
    %c0_92 = arith.constant 0 : index
    %242 = vector.load %arg1[%c112, %c0_92] : memref<320x256xbf16, #tpu.memory_space<vmem>>, vector<32x256xbf16>
    %c0_93 = arith.constant 0 : index
    %c0_94 = arith.constant 0 : index
    %243 = vector.load %arg6[%c0_93, %c0_94] : memref<64x32xf32, #tpu.memory_space<vmem>>, vector<64x32xf32>
    %244 = arith.truncf %243 : vector<64x32xf32> to vector<64x32xbf16>
    %cst_95 = arith.constant dense<0.000000e+00> : vector<64x256xf32>
    %245 = tpu.matmul %244, %242, %cst_95 {dimension_numbers = #tpu.dot_dimension_numbers<[1], [0], [0], [1], [0, 0, 1, 1], [], []>} : vector<64x32xbf16>, vector<32x256xbf16>, vector<64x256xf32> -> vector<64x256xf32>
    %246 = arith.addf %241, %245 : vector<64x256xf32>
    %247 = vector.broadcast %237 : vector<1x256xf32> to vector<64x256xf32>
    %248 = arith.addf %246, %247 : vector<64x256xf32>
    %c0_96 = arith.constant 0 : index
    %c0_97 = arith.constant 0 : index
    %249 = vector.load %arg4[%c0_96, %c0_97] : memref<64x256xf32, #tpu.memory_space<vmem>>, vector<64x256xf32>
    tpu.vector_store %arg4[%c0_96, %c0_97], %248 {strides = array<i32>} : memref<64x256xf32, #tpu.memory_space<vmem>>, vector<64x256xf32>,
    %c144 = arith.constant 144 : index
    %c0_98 = arith.constant 0 : index
    %250 = vector.load %arg1[%c144, %c0_98] : memref<320x256xbf16, #tpu.memory_space<vmem>>, vector<64x256xbf16>
    %cst_99 = arith.constant 0.000000e+00 : f32
    %251 = vector.broadcast %cst_99 : f32 to vector<8x64xf32>
    %cst_100 = arith.constant 0.000000e+00 : f32
    %252 = vector.broadcast %cst_100 : f32 to vector<8x64xf32>
    %c0_101 = arith.constant 0 : index
    %c0_102 = arith.constant 0 : index
    %253 = vector.load %arg4[%c0_101, %c0_102] : memref<64x256xf32, #tpu.memory_space<vmem>>, vector<8x256xf32>
    %c56_103 = arith.constant 56 : index
    %c0_104 = arith.constant 0 : index
    %254 = vector.load %arg4[%c56_103, %c0_104] : memref<64x256xf32, #tpu.memory_space<vmem>>, vector<8x256xf32>
    %255 = arith.select %18, %253, %254 : vector<8x256xi1>, vector<8x256xf32>
    %256 = arith.truncf %251 : vector<8x64xf32> to vector<8x64xbf16>
    %cst_105 = arith.constant dense<0.000000e+00> : vector<8x256xf32>
    %257 = tpu.matmul %256, %250, %cst_105 {dimension_numbers = #tpu.dot_dimension_numbers<[1], [0], [0], [1], [0, 0, 1, 1], [], []>} : vector<8x64xbf16>, vector<64x256xbf16>, vector<8x256xf32> -> vector<8x256xf32>
    %258 = arith.addf %255, %257 : vector<8x256xf32>
    %259 = vector.extract_strided_slice %258 {offsets = [0, 0], sizes = [8, 192], strides = [1, 1]} : vector<8x256xf32> to vector<8x192xf32>
    %260 = arith.negf %259 : vector<8x192xf32>
    %261 = math.exp %260 : vector<8x192xf32>
    %cst_106 = arith.constant 1.000000e+00 : f32
    %262 = vector.broadcast %cst_106 : f32 to vector<8x192xf32>
    %263 = arith.addf %262, %261 : vector<8x192xf32>
    %264 = arith.divf %262, %263 : vector<8x192xf32>
    %265 = vector.extract_strided_slice %258 {offsets = [0, 192], sizes = [8, 64], strides = [1, 1]} : vector<8x256xf32> to vector<8x64xf32>
    %266 = math.tanh %265 : vector<8x64xf32>
    %267 = vector.extract_strided_slice %264 {offsets = [0, 64], sizes = [8, 64], strides = [1, 1]} : vector<8x192xf32> to vector<8x64xf32>
    %268 = arith.mulf %267, %252 : vector<8x64xf32>
    %269 = vector.extract_strided_slice %264 {offsets = [0, 0], sizes = [8, 64], strides = [1, 1]} : vector<8x192xf32> to vector<8x64xf32>
    %270 = arith.mulf %269, %266 : vector<8x64xf32>
    %271 = arith.addf %268, %270 : vector<8x64xf32>
    %272 = vector.extract_strided_slice %264 {offsets = [0, 128], sizes = [8, 64], strides = [1, 1]} : vector<8x192xf32> to vector<8x64xf32>
    %273 = math.tanh %271 : vector<8x64xf32>
    %274 = arith.mulf %272, %273 : vector<8x64xf32>
    %275 = vector.extract_strided_slice %274 {offsets = [0, 32], sizes = [8, 32], strides = [1, 1]} : vector<8x64xf32> to vector<8x32xf32>
    %c8_107 = arith.constant 8 : index
    %c0_108 = arith.constant 0 : index
    %276 = vector.load %arg4[%c8_107, %c0_108] : memref<64x256xf32, #tpu.memory_space<vmem>>, vector<8x256xf32>
    %c48_109 = arith.constant 48 : index
    %c0_110 = arith.constant 0 : index
    %277 = vector.load %arg4[%c48_109, %c0_110] : memref<64x256xf32, #tpu.memory_space<vmem>>, vector<8x256xf32>
    %278 = arith.select %18, %276, %277 : vector<8x256xi1>, vector<8x256xf32>
    %279 = arith.truncf %274 : vector<8x64xf32> to vector<8x64xbf16>
    %cst_111 = arith.constant dense<0.000000e+00> : vector<8x256xf32>
    %280 = tpu.matmul %279, %250, %cst_111 {dimension_numbers = #tpu.dot_dimension_numbers<[1], [0], [0], [1], [0, 0, 1, 1], [], []>} : vector<8x64xbf16>, vector<64x256xbf16>, vector<8x256xf32> -> vector<8x256xf32>
    %281 = arith.addf %278, %280 : vector<8x256xf32>
    %282 = vector.extract_strided_slice %281 {offsets = [0, 0], sizes = [8, 192], strides = [1, 1]} : vector<8x256xf32> to vector<8x192xf32>
    %283 = arith.negf %282 : vector<8x192xf32>
    %284 = math.exp %283 : vector<8x192xf32>
    %cst_112 = arith.constant 1.000000e+00 : f32
    %285 = vector.broadcast %cst_112 : f32 to vector<8x192xf32>
    %286 = arith.addf %285, %284 : vector<8x192xf32>
    %287 = arith.divf %285, %286 : vector<8x192xf32>
    %288 = vector.extract_strided_slice %281 {offsets = [0, 192], sizes = [8, 64], strides = [1, 1]} : vector<8x256xf32> to vector<8x64xf32>
    %289 = math.tanh %288 : vector<8x64xf32>
    %290 = vector.extract_strided_slice %287 {offsets = [0, 64], sizes = [8, 64], strides = [1, 1]} : vector<8x192xf32> to vector<8x64xf32>
    %291 = arith.mulf %290, %271 : vector<8x64xf32>
    %292 = vector.extract_strided_slice %287 {offsets = [0, 0], sizes = [8, 64], strides = [1, 1]} : vector<8x192xf32> to vector<8x64xf32>
    %293 = arith.mulf %292, %289 : vector<8x64xf32>
    %294 = arith.addf %291, %293 : vector<8x64xf32>
    %295 = vector.extract_strided_slice %287 {offsets = [0, 128], sizes = [8, 64], strides = [1, 1]} : vector<8x192xf32> to vector<8x64xf32>
    %296 = math.tanh %294 : vector<8x64xf32>
    %297 = arith.mulf %295, %296 : vector<8x64xf32>
    %c16_113 = arith.constant 16 : index
    %c0_114 = arith.constant 0 : index
    %298 = vector.load %arg4[%c16_113, %c0_114] : memref<64x256xf32, #tpu.memory_space<vmem>>, vector<8x256xf32>
    %c40_115 = arith.constant 40 : index
    %c0_116 = arith.constant 0 : index
    %299 = vector.load %arg4[%c40_115, %c0_116] : memref<64x256xf32, #tpu.memory_space<vmem>>, vector<8x256xf32>
    %300 = arith.select %18, %298, %299 : vector<8x256xi1>, vector<8x256xf32>
    %301 = arith.truncf %297 : vector<8x64xf32> to vector<8x64xbf16>
    %cst_117 = arith.constant dense<0.000000e+00> : vector<8x256xf32>
    %302 = tpu.matmul %301, %250, %cst_117 {dimension_numbers = #tpu.dot_dimension_numbers<[1], [0], [0], [1], [0, 0, 1, 1], [], []>} : vector<8x64xbf16>, vector<64x256xbf16>, vector<8x256xf32> -> vector<8x256xf32>
    %303 = arith.addf %300, %302 : vector<8x256xf32>
    %304 = vector.extract_strided_slice %303 {offsets = [0, 0], sizes = [8, 192], strides = [1, 1]} : vector<8x256xf32> to vector<8x192xf32>
    %305 = arith.negf %304 : vector<8x192xf32>
    %306 = math.exp %305 : vector<8x192xf32>
    %cst_118 = arith.constant 1.000000e+00 : f32
    %307 = vector.broadcast %cst_118 : f32 to vector<8x192xf32>
    %308 = arith.addf %307, %306 : vector<8x192xf32>
    %309 = arith.divf %307, %308 : vector<8x192xf32>
    %310 = vector.extract_strided_slice %303 {offsets = [0, 192], sizes = [8, 64], strides = [1, 1]} : vector<8x256xf32> to vector<8x64xf32>
    %311 = math.tanh %310 : vector<8x64xf32>
    %312 = vector.extract_strided_slice %309 {offsets = [0, 64], sizes = [8, 64], strides = [1, 1]} : vector<8x192xf32> to vector<8x64xf32>
    %313 = arith.mulf %312, %294 : vector<8x64xf32>
    %314 = vector.extract_strided_slice %309 {offsets = [0, 0], sizes = [8, 64], strides = [1, 1]} : vector<8x192xf32> to vector<8x64xf32>
    %315 = arith.mulf %314, %311 : vector<8x64xf32>
    %316 = arith.addf %313, %315 : vector<8x64xf32>
    %317 = vector.extract_strided_slice %309 {offsets = [0, 128], sizes = [8, 64], strides = [1, 1]} : vector<8x192xf32> to vector<8x64xf32>
    %318 = math.tanh %316 : vector<8x64xf32>
    %319 = arith.mulf %317, %318 : vector<8x64xf32>
    %c24_119 = arith.constant 24 : index
    %c0_120 = arith.constant 0 : index
    %320 = vector.load %arg4[%c24_119, %c0_120] : memref<64x256xf32, #tpu.memory_space<vmem>>, vector<8x256xf32>
    %c32_121 = arith.constant 32 : index
    %c0_122 = arith.constant 0 : index
    %321 = vector.load %arg4[%c32_121, %c0_122] : memref<64x256xf32, #tpu.memory_space<vmem>>, vector<8x256xf32>
    %322 = arith.select %18, %320, %321 : vector<8x256xi1>, vector<8x256xf32>
    %323 = arith.truncf %319 : vector<8x64xf32> to vector<8x64xbf16>
    %cst_123 = arith.constant dense<0.000000e+00> : vector<8x256xf32>
    %324 = tpu.matmul %323, %250, %cst_123 {dimension_numbers = #tpu.dot_dimension_numbers<[1], [0], [0], [1], [0, 0, 1, 1], [], []>} : vector<8x64xbf16>, vector<64x256xbf16>, vector<8x256xf32> -> vector<8x256xf32>
    %325 = arith.addf %322, %324 : vector<8x256xf32>
    %326 = vector.extract_strided_slice %325 {offsets = [0, 0], sizes = [8, 192], strides = [1, 1]} : vector<8x256xf32> to vector<8x192xf32>
    %327 = arith.negf %326 : vector<8x192xf32>
    %328 = math.exp %327 : vector<8x192xf32>
    %cst_124 = arith.constant 1.000000e+00 : f32
    %329 = vector.broadcast %cst_124 : f32 to vector<8x192xf32>
    %330 = arith.addf %329, %328 : vector<8x192xf32>
    %331 = arith.divf %329, %330 : vector<8x192xf32>
    %332 = vector.extract_strided_slice %325 {offsets = [0, 192], sizes = [8, 64], strides = [1, 1]} : vector<8x256xf32> to vector<8x64xf32>
    %333 = math.tanh %332 : vector<8x64xf32>
    %334 = vector.extract_strided_slice %331 {offsets = [0, 64], sizes = [8, 64], strides = [1, 1]} : vector<8x192xf32> to vector<8x64xf32>
    %335 = arith.mulf %334, %316 : vector<8x64xf32>
    %336 = vector.extract_strided_slice %331 {offsets = [0, 0], sizes = [8, 64], strides = [1, 1]} : vector<8x192xf32> to vector<8x64xf32>
    %337 = arith.mulf %336, %333 : vector<8x64xf32>
    %338 = arith.addf %335, %337 : vector<8x64xf32>
    %339 = vector.extract_strided_slice %331 {offsets = [0, 128], sizes = [8, 64], strides = [1, 1]} : vector<8x192xf32> to vector<8x64xf32>
    %340 = math.tanh %338 : vector<8x64xf32>
    %341 = arith.mulf %339, %340 : vector<8x64xf32>
    %c32_125 = arith.constant 32 : index
    %c0_126 = arith.constant 0 : index
    %342 = vector.load %arg4[%c32_125, %c0_126] : memref<64x256xf32, #tpu.memory_space<vmem>>, vector<8x256xf32>
    %c24_127 = arith.constant 24 : index
    %c0_128 = arith.constant 0 : index
    %343 = vector.load %arg4[%c24_127, %c0_128] : memref<64x256xf32, #tpu.memory_space<vmem>>, vector<8x256xf32>
    %344 = arith.select %18, %342, %343 : vector<8x256xi1>, vector<8x256xf32>
    %345 = arith.truncf %341 : vector<8x64xf32> to vector<8x64xbf16>
    %cst_129 = arith.constant dense<0.000000e+00> : vector<8x256xf32>
    %346 = tpu.matmul %345, %250, %cst_129 {dimension_numbers = #tpu.dot_dimension_numbers<[1], [0], [0], [1], [0, 0, 1, 1], [], []>} : vector<8x64xbf16>, vector<64x256xbf16>, vector<8x256xf32> -> vector<8x256xf32>
    %347 = arith.addf %344, %346 : vector<8x256xf32>
    %348 = vector.extract_strided_slice %347 {offsets = [0, 0], sizes = [8, 192], strides = [1, 1]} : vector<8x256xf32> to vector<8x192xf32>
    %349 = arith.negf %348 : vector<8x192xf32>
    %350 = math.exp %349 : vector<8x192xf32>
    %cst_130 = arith.constant 1.000000e+00 : f32
    %351 = vector.broadcast %cst_130 : f32 to vector<8x192xf32>
    %352 = arith.addf %351, %350 : vector<8x192xf32>
    %353 = arith.divf %351, %352 : vector<8x192xf32>
    %354 = vector.extract_strided_slice %347 {offsets = [0, 192], sizes = [8, 64], strides = [1, 1]} : vector<8x256xf32> to vector<8x64xf32>
    %355 = math.tanh %354 : vector<8x64xf32>
    %356 = vector.extract_strided_slice %353 {offsets = [0, 64], sizes = [8, 64], strides = [1, 1]} : vector<8x192xf32> to vector<8x64xf32>
    %357 = arith.mulf %356, %338 : vector<8x64xf32>
    %358 = vector.extract_strided_slice %353 {offsets = [0, 0], sizes = [8, 64], strides = [1, 1]} : vector<8x192xf32> to vector<8x64xf32>
    %359 = arith.mulf %358, %355 : vector<8x64xf32>
    %360 = arith.addf %357, %359 : vector<8x64xf32>
    %361 = vector.extract_strided_slice %353 {offsets = [0, 128], sizes = [8, 64], strides = [1, 1]} : vector<8x192xf32> to vector<8x64xf32>
    %362 = math.tanh %360 : vector<8x64xf32>
    %363 = arith.mulf %361, %362 : vector<8x64xf32>
    %c40_131 = arith.constant 40 : index
    %c0_132 = arith.constant 0 : index
    %364 = vector.load %arg4[%c40_131, %c0_132] : memref<64x256xf32, #tpu.memory_space<vmem>>, vector<8x256xf32>
    %c16_133 = arith.constant 16 : index
    %c0_134 = arith.constant 0 : index
    %365 = vector.load %arg4[%c16_133, %c0_134] : memref<64x256xf32, #tpu.memory_space<vmem>>, vector<8x256xf32>
    %366 = arith.select %18, %364, %365 : vector<8x256xi1>, vector<8x256xf32>
    %367 = arith.truncf %363 : vector<8x64xf32> to vector<8x64xbf16>
    %cst_135 = arith.constant dense<0.000000e+00> : vector<8x256xf32>
    %368 = tpu.matmul %367, %250, %cst_135 {dimension_numbers = #tpu.dot_dimension_numbers<[1], [0], [0], [1], [0, 0, 1, 1], [], []>} : vector<8x64xbf16>, vector<64x256xbf16>, vector<8x256xf32> -> vector<8x256xf32>
    %369 = arith.addf %366, %368 : vector<8x256xf32>
    %370 = vector.extract_strided_slice %369 {offsets = [0, 0], sizes = [8, 192], strides = [1, 1]} : vector<8x256xf32> to vector<8x192xf32>
    %371 = arith.negf %370 : vector<8x192xf32>
    %372 = math.exp %371 : vector<8x192xf32>
    %cst_136 = arith.constant 1.000000e+00 : f32
    %373 = vector.broadcast %cst_136 : f32 to vector<8x192xf32>
    %374 = arith.addf %373, %372 : vector<8x192xf32>
    %375 = arith.divf %373, %374 : vector<8x192xf32>
    %376 = vector.extract_strided_slice %369 {offsets = [0, 192], sizes = [8, 64], strides = [1, 1]} : vector<8x256xf32> to vector<8x64xf32>
    %377 = math.tanh %376 : vector<8x64xf32>
    %378 = vector.extract_strided_slice %375 {offsets = [0, 64], sizes = [8, 64], strides = [1, 1]} : vector<8x192xf32> to vector<8x64xf32>
    %379 = arith.mulf %378, %360 : vector<8x64xf32>
    %380 = vector.extract_strided_slice %375 {offsets = [0, 0], sizes = [8, 64], strides = [1, 1]} : vector<8x192xf32> to vector<8x64xf32>
    %381 = arith.mulf %380, %377 : vector<8x64xf32>
    %382 = arith.addf %379, %381 : vector<8x64xf32>
    %383 = vector.extract_strided_slice %375 {offsets = [0, 128], sizes = [8, 64], strides = [1, 1]} : vector<8x192xf32> to vector<8x64xf32>
    %384 = math.tanh %382 : vector<8x64xf32>
    %385 = arith.mulf %383, %384 : vector<8x64xf32>
    %c48_137 = arith.constant 48 : index
    %c0_138 = arith.constant 0 : index
    %386 = vector.load %arg4[%c48_137, %c0_138] : memref<64x256xf32, #tpu.memory_space<vmem>>, vector<8x256xf32>
    %c8_139 = arith.constant 8 : index
    %c0_140 = arith.constant 0 : index
    %387 = vector.load %arg4[%c8_139, %c0_140] : memref<64x256xf32, #tpu.memory_space<vmem>>, vector<8x256xf32>
    %388 = arith.select %18, %386, %387 : vector<8x256xi1>, vector<8x256xf32>
    %389 = arith.truncf %385 : vector<8x64xf32> to vector<8x64xbf16>
    %cst_141 = arith.constant dense<0.000000e+00> : vector<8x256xf32>
    %390 = tpu.matmul %389, %250, %cst_141 {dimension_numbers = #tpu.dot_dimension_numbers<[1], [0], [0], [1], [0, 0, 1, 1], [], []>} : vector<8x64xbf16>, vector<64x256xbf16>, vector<8x256xf32> -> vector<8x256xf32>
    %391 = arith.addf %388, %390 : vector<8x256xf32>
    %392 = vector.extract_strided_slice %391 {offsets = [0, 0], sizes = [8, 192], strides = [1, 1]} : vector<8x256xf32> to vector<8x192xf32>
    %393 = arith.negf %392 : vector<8x192xf32>
    %394 = math.exp %393 : vector<8x192xf32>
    %cst_142 = arith.constant 1.000000e+00 : f32
    %395 = vector.broadcast %cst_142 : f32 to vector<8x192xf32>
    %396 = arith.addf %395, %394 : vector<8x192xf32>
    %397 = arith.divf %395, %396 : vector<8x192xf32>
    %398 = vector.extract_strided_slice %391 {offsets = [0, 192], sizes = [8, 64], strides = [1, 1]} : vector<8x256xf32> to vector<8x64xf32>
    %399 = math.tanh %398 : vector<8x64xf32>
    %400 = vector.extract_strided_slice %397 {offsets = [0, 64], sizes = [8, 64], strides = [1, 1]} : vector<8x192xf32> to vector<8x64xf32>
    %401 = arith.mulf %400, %382 : vector<8x64xf32>
    %402 = vector.extract_strided_slice %397 {offsets = [0, 0], sizes = [8, 64], strides = [1, 1]} : vector<8x192xf32> to vector<8x64xf32>
    %403 = arith.mulf %402, %399 : vector<8x64xf32>
    %404 = arith.addf %401, %403 : vector<8x64xf32>
    %405 = vector.extract_strided_slice %397 {offsets = [0, 128], sizes = [8, 64], strides = [1, 1]} : vector<8x192xf32> to vector<8x64xf32>
    %406 = math.tanh %404 : vector<8x64xf32>
    %407 = arith.mulf %405, %406 : vector<8x64xf32>
    %c56_143 = arith.constant 56 : index
    %c0_144 = arith.constant 0 : index
    %408 = vector.load %arg4[%c56_143, %c0_144] : memref<64x256xf32, #tpu.memory_space<vmem>>, vector<8x256xf32>
    %c0_145 = arith.constant 0 : index
    %c0_146 = arith.constant 0 : index
    %409 = vector.load %arg4[%c0_145, %c0_146] : memref<64x256xf32, #tpu.memory_space<vmem>>, vector<8x256xf32>
    %410 = arith.select %18, %408, %409 : vector<8x256xi1>, vector<8x256xf32>
    %411 = arith.truncf %407 : vector<8x64xf32> to vector<8x64xbf16>
    %cst_147 = arith.constant dense<0.000000e+00> : vector<8x256xf32>
    %412 = tpu.matmul %411, %250, %cst_147 {dimension_numbers = #tpu.dot_dimension_numbers<[1], [0], [0], [1], [0, 0, 1, 1], [], []>} : vector<8x64xbf16>, vector<64x256xbf16>, vector<8x256xf32> -> vector<8x256xf32>
    %413 = arith.addf %410, %412 : vector<8x256xf32>
    %414 = vector.extract_strided_slice %413 {offsets = [0, 0], sizes = [8, 192], strides = [1, 1]} : vector<8x256xf32> to vector<8x192xf32>
    %415 = arith.negf %414 : vector<8x192xf32>
    %416 = math.exp %415 : vector<8x192xf32>
    %cst_148 = arith.constant 1.000000e+00 : f32
    %417 = vector.broadcast %cst_148 : f32 to vector<8x192xf32>
    %418 = arith.addf %417, %416 : vector<8x192xf32>
    %419 = arith.divf %417, %418 : vector<8x192xf32>
    %420 = vector.extract_strided_slice %413 {offsets = [0, 192], sizes = [8, 64], strides = [1, 1]} : vector<8x256xf32> to vector<8x64xf32>
    %421 = math.tanh %420 : vector<8x64xf32>
    %422 = vector.extract_strided_slice %419 {offsets = [0, 64], sizes = [8, 64], strides = [1, 1]} : vector<8x192xf32> to vector<8x64xf32>
    %423 = arith.mulf %422, %404 : vector<8x64xf32>
    %424 = vector.extract_strided_slice %419 {offsets = [0, 0], sizes = [8, 64], strides = [1, 1]} : vector<8x192xf32> to vector<8x64xf32>
    %425 = arith.mulf %424, %421 : vector<8x64xf32>
    %426 = arith.addf %423, %425 : vector<8x64xf32>
    %427 = vector.extract_strided_slice %419 {offsets = [0, 128], sizes = [8, 64], strides = [1, 1]} : vector<8x192xf32> to vector<8x64xf32>
    %428 = math.tanh %426 : vector<8x64xf32>
    %429 = arith.mulf %427, %428 : vector<8x64xf32>
    %430 = vector.extract_strided_slice %429 {offsets = [0, 0], sizes = [8, 32], strides = [1, 1]} : vector<8x64xf32> to vector<8x32xf32>
    %431 = tpu.concatenate %430, %275 in 1 : vector<8x32xf32>, vector<8x32xf32> -> vector<8x64xf32>
    %c208 = arith.constant 208 : index
    %c0_149 = arith.constant 0 : index
    %432 = vector.load %arg1[%c208, %c0_149] : memref<320x256xbf16, #tpu.memory_space<vmem>>, vector<64x32xbf16>
    %c2 = arith.constant 2 : index
    %c0_150 = arith.constant 0 : index
    %433 = vector.load %arg2[%c2, %c0_150] : memref<8x256xf32, #tpu.memory_space<vmem>>, vector<1x32xf32>
    %434 = arith.truncf %431 : vector<8x64xf32> to vector<8x64xbf16>
    %cst_151 = arith.constant dense<0.000000e+00> : vector<8x32xf32>
    %435 = tpu.matmul %434, %432, %cst_151 {dimension_numbers = #tpu.dot_dimension_numbers<[1], [0], [0], [1], [0, 0, 1, 1], [], []>} : vector<8x64xbf16>, vector<64x32xbf16>, vector<8x32xf32> -> vector<8x32xf32>
    %436 = vector.broadcast %433 : vector<1x32xf32> to vector<8x32xf32>
    %437 = arith.addf %435, %436 : vector<8x32xf32>
    %cst_152 = arith.constant 0.000000e+00 : f32
    %438 = vector.broadcast %cst_152 : f32 to vector<8x32xf32>
    %439 = arith.maximumf %437, %438 : vector<8x32xf32>
    %c272 = arith.constant 272 : index
    %c0_153 = arith.constant 0 : index
    %440 = vector.load %arg1[%c272, %c0_153] : memref<320x256xbf16, #tpu.memory_space<vmem>>, vector<32x16xbf16>
    %c3 = arith.constant 3 : index
    %c0_154 = arith.constant 0 : index
    %441 = vector.load %arg2[%c3, %c0_154] : memref<8x256xf32, #tpu.memory_space<vmem>>, vector<1x16xf32>
    %442 = arith.truncf %439 : vector<8x32xf32> to vector<8x32xbf16>
    %cst_155 = arith.constant dense<0.000000e+00> : vector<8x16xf32>
    %443 = tpu.matmul %442, %440, %cst_155 {dimension_numbers = #tpu.dot_dimension_numbers<[1], [0], [0], [1], [0, 0, 1, 1], [], []>} : vector<8x32xbf16>, vector<32x16xbf16>, vector<8x16xf32> -> vector<8x16xf32>
    %444 = vector.broadcast %441 : vector<1x16xf32> to vector<8x16xf32>
    %445 = arith.addf %443, %444 : vector<8x16xf32>
    %cst_156 = arith.constant 0.000000e+00 : f32
    %446 = vector.broadcast %cst_156 : f32 to vector<8x16xf32>
    %447 = arith.maximumf %445, %446 : vector<8x16xf32>
    %c304 = arith.constant 304 : index
    %c0_157 = arith.constant 0 : index
    %448 = vector.load %arg1[%c304, %c0_157] : memref<320x256xbf16, #tpu.memory_space<vmem>>, vector<16x128xbf16>
    %c4 = arith.constant 4 : index
    %c0_158 = arith.constant 0 : index
    %449 = vector.load %arg2[%c4, %c0_158] : memref<8x256xf32, #tpu.memory_space<vmem>>, vector<1x128xf32>
    %450 = arith.truncf %447 : vector<8x16xf32> to vector<8x16xbf16>
    %cst_159 = arith.constant dense<0.000000e+00> : vector<8x128xf32>
    %451 = tpu.matmul %450, %448, %cst_159 {dimension_numbers = #tpu.dot_dimension_numbers<[1], [0], [0], [1], [0, 0, 1, 1], [], []>} : vector<8x16xbf16>, vector<16x128xbf16>, vector<8x128xf32> -> vector<8x128xf32>
    %452 = vector.broadcast %449 : vector<1x128xf32> to vector<8x128xf32>
    %453 = arith.addf %451, %452 : vector<8x128xf32>
    %c0_160 = arith.constant 0 : index
    %c0_161 = arith.constant 0 : index
    %454 = vector.load %arg3[%c0_160, %c0_161] : memref<8x128xf32, #tpu.memory_space<vmem>>, vector<8x128xf32>
    tpu.vector_store %arg3[%c0_160, %c0_161], %453 {strides = array<i32>} : memref<8x128xf32, #tpu.memory_space<vmem>>, vector<8x128xf32>,
    return
  }
}

</mosaic_0001>

<llo_original>
// kernel: encoder_forward.1
$region0: #{encoder_forward.1}
  #allocation0 [shape = 'u32[]', space=smem, size = 0x4, offset = 0x4, fixed_abs, tag = 'smem constant byte address 0x4 - core index']
  #allocation1 [shape = 'u32[72,128]{1,0:T(1,128)}', space=vmem, size = 0x9000, scoped, tag = 'internal scratch']
  #allocation2 [shape = 'f32[64,256]{1,0:T(8,128)}', space=vmem, size = 0x10000, scoped, tag = 'scratch operand']
  #allocation3 [shape = 'f32[64,32]{1,0:T(8,128)}', space=vmem, size = 0x8000, scoped, tag = 'scratch operand']
  #allocation4 [shape = 'f32[64,32]{1,0:T(8,128)}', space=vmem, size = 0x8000, scoped, tag = 'scratch operand']
  %s0 = inlined_call_operand.vmem [shape: bf16[64,16], index: 0, kind: input, shape index: {}]
  %s1 = inlined_call_operand.hbm [shape: bf16[320,256], index: 1, kind: input, shape index: {}]
  %s2 = inlined_call_operand.vmem [shape: f32[8,256], index: 2, kind: input, shape index: {}]
  %s3 = inlined_call_operand.vmem [shape: f32[8,128], index: 3, kind: output, shape index: {}]
  %s4 = sld [smem:[#allocation0]]
  $region26: #{encoder_forward.1} parent=0
    _
  %s6 = ssub.s32 1, %s4
  %s7 = scalar_select 0, %s6, %s4
  $region1: #{encoder_forward.1} parent=0
    #allocation5 [shape = 'u8[163840]{0}', space=vmem, size = 0x28000, scoped, tag = 'input window, operand 1, single buffered']
    #allocation6 [shape = 's32[1]{0}', space=sflag, size = 0x4, scoped, tag = 'scoped memory for encoder_forward.1']
    %8 = vsyncpa [#allocation6], 0
    // Predicated region
    $region2: #{encoder_forward.1} parent=1 // pred_check
      _
    $region3: #{encoder_forward.1} parent=1 // pred_check_branch
      %10 = sbr.rel (0) target = $region5
    $region4: #{encoder_forward.1} parent=1 // pred_region
      _
    $region5: #{encoder_forward.1} parent=1 // pred_fallthru
      _
    // Predicated region
    $region6: #{encoder_forward.1} parent=1 // pred_check
      _
    $region7: #{encoder_forward.1} parent=1 // pred_check_branch
      %12 = sbr.rel (0) target = $region9
    $region8: #{encoder_forward.1} parent=1 // pred_region
      %14 = vsyncadd [#allocation6], 0
      %s15 = sshll.u32 %s1, 4
      %s16 = int_to_ptr.hbm [resolvable:$true] %s15
      %s17 = sshll.u32 [#allocation5], 4
      %s18 = int_to_ptr.vmem [resolvable:$true] %s17
      %23 = dma.hbm_to_vmem [thread:$0]  %s16, 5120, %s18, [#allocation6], 128, 128, 8
    $region9: #{encoder_forward.1} parent=1 // pred_fallthru
      _
    // Predicated region
    $region10: #{encoder_forward.1} parent=1 // pred_check
      _
    $region11: #{encoder_forward.1} parent=1 // pred_check_branch
      %25 = sbr.rel (0) target = $region13
    $region12: #{encoder_forward.1} parent=1 // pred_region
      _
    $region13: #{encoder_forward.1} parent=1 // pred_fallthru
      _
    // Predicated region
    $region14: #{encoder_forward.1} parent=1 // pred_check
      _
    $region15: #{encoder_forward.1} parent=1 // pred_check_branch
      %27 = sbr.rel (0) target = $region17
    $region16: #{encoder_forward.1} parent=1 // pred_region
      %29 = dma.done [#allocation6], 5120
    $region17: #{encoder_forward.1} parent=1 // pred_fallthru
      _
    %v31 = vlaneseq
    %v32 = vand.u32 %v31, 127
    %v33 = vadd.s32 %v32, 128
    %vm34 = vcmp.lt.s32.totalorder %v32, 0
    %v35 = vsub.s32 0, %v32
    %v36 = vsel %vm34, %v35, %v32
    %v37 = vshrl.u32 %v36, 6
    %v38 = vand.u32 %v36, 63
    %v39 = vsub.s32 0, %v38
    %v40 = vsel %vm34, %v39, %v38
    %vm41 = vcmp.lt.s32.totalorder %v33, 0
    %v42 = vsub.s32 0, %v33
    %v43 = vsel %vm41, %v42, %v33
    %v44 = vshrl.u32 %v43, 6
    %v45 = vand.u32 %v43, 63
    %v46 = vsub.s32 0, %v45
    %v47 = vsel %vm41, %v46, %v45
    %vm48 = vcmp.ne.s32.totalorder %v40, 0
    %vm49 = vcmp.ne.s32.totalorder %v47, 0
    %vm50 = vcmp.lt.s32.totalorder %v40, 0
    %vm51 = vcmp.lt.s32.totalorder %v47, 0
    %vm52 = vmand %vm50, %vm48
    %vm53 = vmand %vm51, %vm49
    %v54 = vadd.s32 %v40, 64
    %v55 = vadd.s32 %v47, 64
    %v56 = vsel %vm52, %v54, %v40
    %v57 = vsel %vm53, %v55, %v47
    %vm58 = vcmp.lt.s32.totalorder %v56, 32
    %vm59 = vcmp.lt.s32.totalorder %v57, 32
    %v60 = vld [vmem:[%s2] ss:$8 sm:$0x3]
    %v61 = vld [vmem:[#allocation5] sm:$0xff]
    %v62 = vld [vmem:[#allocation5 + $0x8] sm:$0xff]
    %v63 = vld [vmem:[%s0] sm:$0xf]
    %v64 = vld [vmem:[%s0 + $0x4] sm:$0xf]
    %v65 = vld [vmem:[%s0 + $0x8] sm:$0xf]
    %v66 = vld [vmem:[%s0 + $0xc] sm:$0xf]
    %v67 = vld [vmem:[%s0 + $0x10] sm:$0xf]
    %v68 = vld [vmem:[%s0 + $0x14] sm:$0xf]
    %v69 = vld [vmem:[%s0 + $0x18] sm:$0xf]
    %v70 = vld [vmem:[%s0 + $0x1c] sm:$0xf]
    %v72 = vperm.slane %v60, 0
    %v73 = vperm.slane %v60, 1
    %v84 = vunpack.c.l.b16 %v63
    %v85 = vunpack.c.l.b16 %v64
    %v86 = vunpack.c.l.b16 %v65
    %v87 = vunpack.c.l.b16 %v66
    %v88 = vunpack.c.l.b16 %v67
    %v89 = vunpack.c.l.b16 %v68
    %v90 = vunpack.c.l.b16 %v69
    %v91 = vunpack.c.l.b16 %v70
    %v92 = vpack.c.b16 %v85, %v84
    %v93 = vpack.c.b16 %v87, %v86
    %v94 = vpack.c.b16 %v89, %v88
    %v95 = vpack.c.b16 %v91, %v90
    %v98 = vunpack.c.l.b16 %v61
    %v99 = vunpack.c.h.b16 %v61
    %v100 = vunpack.c.l.b16 %v62
    %v101 = vunpack.c.h.b16 %v62
    %v102 = vpack.c.b16 %v100, %v98
    %v103 = vpack.c.b16 %v101, %v99
    %vm106 = vcmask 130048
    %v108 = vsel %vm106, %v92, 0
    %v111 = vsel %vm106, %v93, 0
    %v114 = vsel %vm106, %v94, 0
    %v117 = vsel %vm106, %v95, 0
    %119 = vmatpush.bf16.msra.mxu0 0
    %120 = vmatpush.bf16.msra.mxu0 0
    %121 = vmatpush.bf16.msra.mxu0 0
    %122 = vmatpush.bf16.msra.mxu0 0
    %123 = vmatpush.bf16.msra.mxu0 0
    %124 = vmatpush.bf16.msra.mxu0 0
    %125 = vmatpush.bf16.msra.mxu0 0
    %126 = vmatpush.bf16.msra.mxu0 %v102
    %127 = vmatmul.bf16.gmra.mxu0 %v108
    %v128 = vpop.f32.mrf.mxu0
    %v129 = vadd.f32 %v72, %v128
    %v130 = vpop.f32.mrf.mxu0
    %v131 = vadd.f32 %v72, %v130
    %132 = vmatmul.bf16.gmra.mxu0 %v111
    %v133 = vpop.f32.mrf.mxu0
    %v134 = vadd.f32 %v72, %v133
    %v135 = vpop.f32.mrf.mxu0
    %v136 = vadd.f32 %v72, %v135
    %137 = vmatmul.bf16.gmra.mxu0 %v114
    %v138 = vpop.f32.mrf.mxu0
    %v139 = vadd.f32 %v72, %v138
    %v140 = vpop.f32.mrf.mxu0
    %v141 = vadd.f32 %v72, %v140
    %142 = vmatmul.bf16.gmra.mxu0 %v117
    %v143 = vpop.f32.mrf.mxu0
    %v144 = vadd.f32 %v72, %v143
    %v145 = vpop.f32.mrf.mxu0
    %v146 = vadd.f32 %v72, %v145
    %147 = vdwg.mxu0
    %148 = vmatpush.bf16.msra.mxu0 0
    %149 = vmatpush.bf16.msra.mxu0 0
    %150 = vmatpush.bf16.msra.mxu0 0
    %151 = vmatpush.bf16.msra.mxu0 0
    %152 = vmatpush.bf16.msra.mxu0 0
    %153 = vmatpush.bf16.msra.mxu0 0
    %154 = vmatpush.bf16.msra.mxu0 0
    %155 = vmatpush.bf16.msra.mxu0 %v103
    %156 = vmatmul.bf16.gmra.mxu0 %v108
    %v157 = vpop.f32.mrf.mxu0
    %v158 = vadd.f32 %v73, %v157
    %v159 = vpop.f32.mrf.mxu0
    %v160 = vadd.f32 %v73, %v159
    %161 = vmatmul.bf16.gmra.mxu0 %v111
    %v162 = vpop.f32.mrf.mxu0
    %v163 = vadd.f32 %v73, %v162
    %v164 = vpop.f32.mrf.mxu0
    %v165 = vadd.f32 %v73, %v164
    %166 = vmatmul.bf16.gmra.mxu0 %v114
    %v167 = vpop.f32.mrf.mxu0
    %v168 = vadd.f32 %v73, %v167
    %v169 = vpop.f32.mrf.mxu0
    %v170 = vadd.f32 %v73, %v169
    %171 = vmatmul.bf16.gmra.mxu0 %v117
    %v172 = vpop.f32.mrf.mxu0
    %v173 = vadd.f32 %v73, %v172
    %v174 = vpop.f32.mrf.mxu0
    %v175 = vadd.f32 %v73, %v174
    %176 = vdwg.mxu0
    %177 = vst [vmem:[#allocation2] sm:$0xff] %v129
    %178 = vst [vmem:[#allocation2 + $0x8] sm:$0xff] %v158
    %179 = vst [vmem:[#allocation2 + $0x10] sm:$0xff] %v131
    %180 = vst [vmem:[#allocation2 + $0x18] sm:$0xff] %v160
    %181 = vst [vmem:[#allocation2 + $0x20] sm:$0xff] %v134
    %182 = vst [vmem:[#allocation2 + $0x28] sm:$0xff] %v163
    %183 = vst [vmem:[#allocation2 + $0x30] sm:$0xff] %v136
    %184 = vst [vmem:[#allocation2 + $0x38] sm:$0xff] %v165
    %185 = vst [vmem:[#allocation2 + $0x40] sm:$0xff] %v139
    %186 = vst [vmem:[#allocation2 + $0x48] sm:$0xff] %v168
    %187 = vst [vmem:[#allocation2 + $0x50] sm:$0xff] %v141
    %188 = vst [vmem:[#allocation2 + $0x58] sm:$0xff] %v170
    %189 = vst [vmem:[#allocation2 + $0x60] sm:$0xff] %v144
    %190 = vst [vmem:[#allocation2 + $0x68] sm:$0xff] %v173
    %191 = vst [vmem:[#allocation2 + $0x70] sm:$0xff] %v146
    %192 = vst [vmem:[#allocation2 + $0x78] sm:$0xff] %v175
    %v193 = vld [vmem:[#allocation5 + $0x10] sm:$0xff]
    %v194 = vld [vmem:[#allocation5 + $0x18] sm:$0xff]
    %v195 = vld [vmem:[#allocation5 + $0x20] sm:$0xff]
    %v196 = vld [vmem:[#allocation5 + $0x28] sm:$0xff]
    %v197 = vld [vmem:[#allocation5 + $0x30] sm:$0xff]
    %v198 = vld [vmem:[#allocation5 + $0x38] sm:$0xff]
    %v199 = vld [vmem:[#allocation5 + $0x40] sm:$0xff]
    %v200 = vld [vmem:[#allocation5 + $0x48] sm:$0xff]
    %v201 = vld [vmem:[#allocation2] sm:$0xff]
    %v202 = vld [vmem:[#allocation2 + $0x8] sm:$0xff]
    %v203 = vld [vmem:[#allocation2 + $0x70] sm:$0xff]
    %v204 = vld [vmem:[#allocation2 + $0x78] sm:$0xff]
    %v205 = vsel %vm58, %v201, %v203
    %v206 = vsel %vm59, %v202, %v204
    %v215 = vunpack.c.l.b16 %v193
    %v216 = vunpack.c.h.b16 %v193
    %v217 = vunpack.c.l.b16 %v194
    %v218 = vunpack.c.h.b16 %v194
    %v219 = vunpack.c.l.b16 %v195
    %v220 = vunpack.c.h.b16 %v195
    %v221 = vunpack.c.l.b16 %v196
    %v222 = vunpack.c.h.b16 %v196
    %v223 = vunpack.c.l.b16 %v197
    %v224 = vunpack.c.h.b16 %v197
    %v225 = vunpack.c.l.b16 %v198
    %v226 = vunpack.c.h.b16 %v198
    %v227 = vunpack.c.l.b16 %v199
    %v228 = vunpack.c.h.b16 %v199
    %v229 = vunpack.c.l.b16 %v200
    %v230 = vunpack.c.h.b16 %v200
    %v231 = vpack.c.b16 %v217, %v215
    %v232 = vpack.c.b16 %v218, %v216
    %v233 = vpack.c.b16 %v221, %v219
    %v234 = vpack.c.b16 %v222, %v220
    %v235 = vpack.c.b16 %v225, %v223
    %v236 = vpack.c.b16 %v226, %v224
    %v237 = vpack.c.b16 %v229, %v227
    %v238 = vpack.c.b16 %v230, %v228
    %vm247 = vcmask 523264
    %v249 = vsel %vm247, 0, 0
    %251 = vmatpush.bf16.msra.mxu0 0
    %252 = vmatpush.bf16.msra.mxu0 0
    %253 = vmatpush.bf16.msra.mxu0 0
    %254 = vmatpush.bf16.msra.mxu0 0
    %255 = vmatpush.bf16.msra.mxu0 %v237
    %256 = vmatpush.bf16.msra.mxu0 %v235
    %257 = vmatpush.bf16.msra.mxu0 %v233
    %258 = vmatpush.bf16.msra.mxu0 %v231
    %259 = vmatmul.bf16.gmra.mxu0 %v249
    %v260 = vpop.f32.mrf.mxu0
    %v261 = vadd.f32 0.0, %v260
    %v262 = vpop.f32.mrf.mxu0
    %263 = vdwg.mxu0
    %264 = vmatpush.bf16.msra.mxu0 0
    %265 = vmatpush.bf16.msra.mxu0 0
    %266 = vmatpush.bf16.msra.mxu0 0
    %267 = vmatpush.bf16.msra.mxu0 0
    %268 = vmatpush.bf16.msra.mxu0 %v238
    %269 = vmatpush.bf16.msra.mxu0 %v236
    %270 = vmatpush.bf16.msra.mxu0 %v234
    %271 = vmatpush.bf16.msra.mxu0 %v232
    %272 = vmatmul.bf16.gmra.mxu0 %v249
    %v273 = vpop.f32.mrf.mxu0
    %v274 = vadd.f32 0.0, %v273
    %v275 = vpop.f32.mrf.mxu0
    %276 = vdwg.mxu0
    %v277 = vadd.f32 %v205, %v261
    %v278 = vadd.f32 %v206, %v274
    %v279 = vxor.u32 %v277, 2147483648
    %v280 = vxor.u32 %v278, 2147483648
    %v281 = vmul.f32 %v279, 1.442695
    %v282 = vpow.pop %v281
    %v283 = vmul.f32 %v280, 1.442695
    %v284 = vpow.pop %v283
    %v285 = vadd.f32 %v282, 1.0
    %v286 = vadd.f32 %v284, 1.0
    %v287 = vrcp.pop %v285
    %v288 = vmul.f32 %v285, %v287
    %v289 = vsub.f32 1.0, %v288
    %v290 = vmul.f32 %v287, %v289
    %v291 = vadd.f32 %v287, %v290
    %vm292 = vweird.f32 %v285
    %vm293 = vweird.f32 %v287
    %vm294 = vmor %vm292, %vm293
    %v295 = vsel %vm294, %v287, %v291
    %v296 = vand.u32 2147483647, %v285
    %vm297 = vcmp.eq.f32.partialorder %v296, 8.507059e+37
    %v298 = vand.u32 %v285, 2147483648
    %v299 = vor.u32 1.1754944e-38, %v298
    %v300 = vsel %vm297, %v299, %v295
    %v301 = vmul.f32 1.0, %v300
    %v302 = vrcp.pop %v286
    %v303 = vmul.f32 %v286, %v302
    %v304 = vsub.f32 1.0, %v303
    %v305 = vmul.f32 %v302, %v304
    %v306 = vadd.f32 %v302, %v305
    %vm307 = vweird.f32 %v286
    %vm308 = vweird.f32 %v302
    %vm309 = vmor %vm307, %vm308
    %v310 = vsel %vm309, %v302, %v306
    %v311 = vand.u32 2147483647, %v286
    %vm312 = vcmp.eq.f32.partialorder %v311, 8.507059e+37
    %v313 = vand.u32 %v286, 2147483648
    %v314 = vor.u32 1.1754944e-38, %v313
    %v315 = vsel %vm312, %v314, %v310
    %v316 = vmul.f32 1.0, %v315
    %v317 = vtanh.pop %v278
    %v318 = vmul.f32 %v301, 0.0
    %320 = vrot.lane.b32.xlu0 %v317, 64
    %v321 = vpop.permute.xlu0 %320
    %v323 = vmul.f32 %v301, %v321
    %325 = vrot.lane.b32.xlu0 %v323, 64
    %v326 = vpop.permute.xlu0 %325
    %v328 = vadd.f32 %v318, %v326
    %v329 = vtanh.pop %v328
    %331 = vrot.lane.b32.xlu0 %v329, 64
    %v332 = vpop.permute.xlu0 %331
    %v334 = vmul.f32 %v316, %v332
    %vm335 = vcmask 261120
    %336 = vst.msk [vmem:[#allocation3] sm:$0xff] %vm335, %v334
    %338 = vrot.lane.b32.xlu0 %v334, 96
    %v339 = vpop.permute.xlu0 %338
    %341 = vst.msk [vmem:[#allocation4 + $0x38] sm:$0xff] %vm335, %v339
    %v342 = vld [vmem:[#allocation2 + $0x10] sm:$0xff]
    %v343 = vld [vmem:[#allocation2 + $0x18] sm:$0xff]
    %v344 = vld [vmem:[#allocation2 + $0x60] sm:$0xff]
    %v345 = vld [vmem:[#allocation2 + $0x68] sm:$0xff]
    %v346 = vsel %vm58, %v342, %v344
    %v347 = vsel %vm59, %v343, %v345
    %v348 = vpack.c.bf16 %v334, %v334
    %v350 = vsel %vm247, %v348, 0
    %352 = vmatpush.bf16.msra.mxu0 0
    %353 = vmatpush.bf16.msra.mxu0 0
    %354 = vmatpush.bf16.msra.mxu0 0
    %355 = vmatpush.bf16.msra.mxu0 0
    %356 = vmatpush.bf16.msra.mxu0 %v237
    %357 = vmatpush.bf16.msra.mxu0 %v235
    %358 = vmatpush.bf16.msra.mxu0 %v233
    %359 = vmatpush.bf16.msra.mxu0 %v231
    %360 = vmatmul.bf16.gmra.mxu0 %v350
    %v361 = vpop.f32.mrf.mxu0
    %v362 = vadd.f32 0.0, %v361
    %v363 = vpop.f32.mrf.mxu0
    %364 = vdwg.mxu0
    %365 = vmatpush.bf16.msra.mxu0 0
    %366 = vmatpush.bf16.msra.mxu0 0
    %367 = vmatpush.bf16.msra.mxu0 0
    %368 = vmatpush.bf16.msra.mxu0 0
    %369 = vmatpush.bf16.msra.mxu0 %v238
    %370 = vmatpush.bf16.msra.mxu0 %v236
    %371 = vmatpush.bf16.msra.mxu0 %v234
    %372 = vmatpush.bf16.msra.mxu0 %v232
    %373 = vmatmul.bf16.gmra.mxu0 %v350
    %v374 = vpop.f32.mrf.mxu0
    %v375 = vadd.f32 0.0, %v374
    %v376 = vpop.f32.mrf.mxu0
    %377 = vdwg.mxu0
    %v378 = vadd.f32 %v346, %v362
    %v379 = vadd.f32 %v347, %v375
    %v380 = vxor.u32 %v378, 2147483648
    %v381 = vxor.u32 %v379, 2147483648
    %v382 = vmul.f32 %v380, 1.442695
    %v383 = vpow.pop %v382
    %v384 = vmul.f32 %v381, 1.442695
    %v385 = vpow.pop %v384
    %v386 = vadd.f32 %v383, 1.0
    %v387 = vadd.f32 %v385, 1.0
    %v388 = vrcp.pop %v386
    %v389 = vmul.f32 %v386, %v388
    %v390 = vsub.f32 1.0, %v389
    %v391 = vmul.f32 %v388, %v390
    %v392 = vadd.f32 %v388, %v391
    %vm393 = vweird.f32 %v386
    %vm394 = vweird.f32 %v388
    %vm395 = vmor %vm393, %vm394
    %v396 = vsel %vm395, %v388, %v392
    %v397 = vand.u32 2147483647, %v386
    %vm398 = vcmp.eq.f32.partialorder %v397, 8.507059e+37
    %v399 = vand.u32 %v386, 2147483648
    %v400 = vor.u32 1.1754944e-38, %v399
    %v401 = vsel %vm398, %v400, %v396
    %v402 = vmul.f32 1.0, %v401
    %v403 = vrcp.pop %v387
    %v404 = vmul.f32 %v387, %v403
    %v405 = vsub.f32 1.0, %v404
    %v406 = vmul.f32 %v403, %v405
    %v407 = vadd.f32 %v403, %v406
    %vm408 = vweird.f32 %v387
    %vm409 = vweird.f32 %v403
    %vm410 = vmor %vm408, %vm409
    %v411 = vsel %vm410, %v403, %v407
    %v412 = vand.u32 2147483647, %v387
    %vm413 = vcmp.eq.f32.partialorder %v412, 8.507059e+37
    %v414 = vand.u32 %v387, 2147483648
    %v415 = vor.u32 1.1754944e-38, %v414
    %v416 = vsel %vm413, %v415, %v411
    %v417 = vmul.f32 1.0, %v416
    %v418 = vtanh.pop %v379
    %v419 = vmul.f32 %v402, %v328
    %421 = vrot.lane.b32.xlu0 %v418, 64
    %v422 = vpop.permute.xlu0 %421
    %v424 = vmul.f32 %v402, %v422
    %426 = vrot.lane.b32.xlu0 %v424, 64
    %v427 = vpop.permute.xlu0 %426
    %v429 = vadd.f32 %v419, %v427
    %v430 = vtanh.pop %v429
    %432 = vrot.lane.b32.xlu0 %v430, 64
    %v433 = vpop.permute.xlu0 %432
    %v435 = vmul.f32 %v417, %v433
    %436 = vst.msk [vmem:[#allocation3 + $0x8] sm:$0xff] %vm335, %v435
    %438 = vrot.lane.b32.xlu0 %v435, 96
    %v439 = vpop.permute.xlu0 %438
    %441 = vst.msk [vmem:[#allocation4 + $0x30] sm:$0xff] %vm335, %v439
    %v442 = vld [vmem:[#allocation2 + $0x20] sm:$0xff]
    %v443 = vld [vmem:[#allocation2 + $0x28] sm:$0xff]
    %v444 = vld [vmem:[#allocation2 + $0x50] sm:$0xff]
    %v445 = vld [vmem:[#allocation2 + $0x58] sm:$0xff]
    %v446 = vsel %vm58, %v442, %v444
    %v447 = vsel %vm59, %v443, %v445
    %v448 = vpack.c.bf16 %v435, %v435
    %v450 = vsel %vm247, %v448, 0
    %452 = vmatpush.bf16.msra.mxu0 0
    %453 = vmatpush.bf16.msra.mxu0 0
    %454 = vmatpush.bf16.msra.mxu0 0
    %455 = vmatpush.bf16.msra.mxu0 0
    %456 = vmatpush.bf16.msra.mxu0 %v237
    %457 = vmatpush.bf16.msra.mxu0 %v235
    %458 = vmatpush.bf16.msra.mxu0 %v233
    %459 = vmatpush.bf16.msra.mxu0 %v231
    %460 = vmatmul.bf16.gmra.mxu0 %v450
    %v461 = vpop.f32.mrf.mxu0
    %v462 = vadd.f32 0.0, %v461
    %v463 = vpop.f32.mrf.mxu0
    %464 = vdwg.mxu0
    %465 = vmatpush.bf16.msra.mxu0 0
    %466 = vmatpush.bf16.msra.mxu0 0
    %467 = vmatpush.bf16.msra.mxu0 0
    %468 = vmatpush.bf16.msra.mxu0 0
    %469 = vmatpush.bf16.msra.mxu0 %v238
    %470 = vmatpush.bf16.msra.mxu0 %v236
    %471 = vmatpush.bf16.msra.mxu0 %v234
    %472 = vmatpush.bf16.msra.mxu0 %v232
    %473 = vmatmul.bf16.gmra.mxu0 %v450
    %v474 = vpop.f32.mrf.mxu0
    %v475 = vadd.f32 0.0, %v474
    %v476 = vpop.f32.mrf.mxu0
    %477 = vdwg.mxu0
    %v478 = vadd.f32 %v446, %v462
    %v479 = vadd.f32 %v447, %v475
    %v480 = vxor.u32 %v478, 2147483648
    %v481 = vxor.u32 %v479, 2147483648
    %v482 = vmul.f32 %v480, 1.442695
    %v483 = vpow.pop %v482
    %v484 = vmul.f32 %v481, 1.442695
    %v485 = vpow.pop %v484
    %v486 = vadd.f32 %v483, 1.0
    %v487 = vadd.f32 %v485, 1.0
    %v488 = vrcp.pop %v486
    %v489 = vmul.f32 %v486, %v488
    %v490 = vsub.f32 1.0, %v489
    %v491 = vmul.f32 %v488, %v490
    %v492 = vadd.f32 %v488, %v491
    %vm493 = vweird.f32 %v486
    %vm494 = vweird.f32 %v488
    %vm495 = vmor %vm493, %vm494
    %v496 = vsel %vm495, %v488, %v492
    %v497 = vand.u32 2147483647, %v486
    %vm498 = vcmp.eq.f32.partialorder %v497, 8.507059e+37
    %v499 = vand.u32 %v486, 2147483648
    %v500 = vor.u32 1.1754944e-38, %v499
    %v501 = vsel %vm498, %v500, %v496
    %v502 = vmul.f32 1.0, %v501
    %v503 = vrcp.pop %v487
    %v504 = vmul.f32 %v487, %v503
    %v505 = vsub.f32 1.0, %v504
    %v506 = vmul.f32 %v503, %v505
    %v507 = vadd.f32 %v503, %v506
    %vm508 = vweird.f32 %v487
    %vm509 = vweird.f32 %v503
    %vm510 = vmor %vm508, %vm509
    %v511 = vsel %vm510, %v503, %v507
    %v512 = vand.u32 2147483647, %v487
    %vm513 = vcmp.eq.f32.partialorder %v512, 8.507059e+37
    %v514 = vand.u32 %v487, 2147483648
    %v515 = vor.u32 1.1754944e-38, %v514
    %v516 = vsel %vm513, %v515, %v511
    %v517 = vmul.f32 1.0, %v516
    %v518 = vtanh.pop %v479
    %v519 = vmul.f32 %v502, %v429
    %521 = vrot.lane.b32.xlu0 %v518, 64
    %v522 = vpop.permute.xlu0 %521
    %v524 = vmul.f32 %v502, %v522
    %526 = vrot.lane.b32.xlu0 %v524, 64
    %v527 = vpop.permute.xlu0 %526
    %v529 = vadd.f32 %v519, %v527
    %v530 = vtanh.pop %v529
    %532 = vrot.lane.b32.xlu0 %v530, 64
    %v533 = vpop.permute.xlu0 %532
    %v535 = vmul.f32 %v517, %v533
    %536 = vst.msk [vmem:[#allocation3 + $0x10] sm:$0xff] %vm335, %v535
    %538 = vrot.lane.b32.xlu0 %v535, 96
    %v539 = vpop.permute.xlu0 %538
    %541 = vst.msk [vmem:[#allocation4 + $0x28] sm:$0xff] %vm335, %v539
    %v542 = vld [vmem:[#allocation2 + $0x30] sm:$0xff]
    %v543 = vld [vmem:[#allocation2 + $0x38] sm:$0xff]
    %v544 = vld [vmem:[#allocation2 + $0x40] sm:$0xff]
    %v545 = vld [vmem:[#allocation2 + $0x48] sm:$0xff]
    %v546 = vsel %vm58, %v542, %v544
    %v547 = vsel %vm59, %v543, %v545
    %v548 = vpack.c.bf16 %v535, %v535
    %v550 = vsel %vm247, %v548, 0
    %552 = vmatpush.bf16.msra.mxu0 0
    %553 = vmatpush.bf16.msra.mxu0 0
    %554 = vmatpush.bf16.msra.mxu0 0
    %555 = vmatpush.bf16.msra.mxu0 0
    %556 = vmatpush.bf16.msra.mxu0 %v237
    %557 = vmatpush.bf16.msra.mxu0 %v235
    %558 = vmatpush.bf16.msra.mxu0 %v233
    %559 = vmatpush.bf16.msra.mxu0 %v231
    %560 = vmatmul.bf16.gmra.mxu0 %v550
    %v561 = vpop.f32.mrf.mxu0
    %v562 = vadd.f32 0.0, %v561
    %v563 = vpop.f32.mrf.mxu0
    %564 = vdwg.mxu0
    %565 = vmatpush.bf16.msra.mxu0 0
    %566 = vmatpush.bf16.msra.mxu0 0
    %567 = vmatpush.bf16.msra.mxu0 0
    %568 = vmatpush.bf16.msra.mxu0 0
    %569 = vmatpush.bf16.msra.mxu0 %v238
    %570 = vmatpush.bf16.msra.mxu0 %v236
    %571 = vmatpush.bf16.msra.mxu0 %v234
    %572 = vmatpush.bf16.msra.mxu0 %v232
    %573 = vmatmul.bf16.gmra.mxu0 %v550
    %v574 = vpop.f32.mrf.mxu0
    %v575 = vadd.f32 0.0, %v574
    %v576 = vpop.f32.mrf.mxu0
    %577 = vdwg.mxu0
    %v578 = vadd.f32 %v546, %v562
    %v579 = vadd.f32 %v547, %v575
    %v580 = vxor.u32 %v578, 2147483648
    %v581 = vxor.u32 %v579, 2147483648
    %v582 = vmul.f32 %v580, 1.442695
    %v583 = vpow.pop %v582
    %v584 = vmul.f32 %v581, 1.442695
    %v585 = vpow.pop %v584
    %v586 = vadd.f32 %v583, 1.0
    %v587 = vadd.f32 %v585, 1.0
    %v588 = vrcp.pop %v586
    %v589 = vmul.f32 %v586, %v588
    %v590 = vsub.f32 1.0, %v589
    %v591 = vmul.f32 %v588, %v590
    %v592 = vadd.f32 %v588, %v591
    %vm593 = vweird.f32 %v586
    %vm594 = vweird.f32 %v588
    %vm595 = vmor %vm593, %vm594
    %v596 = vsel %vm595, %v588, %v592
    %v597 = vand.u32 2147483647, %v586
    %vm598 = vcmp.eq.f32.partialorder %v597, 8.507059e+37
    %v599 = vand.u32 %v586, 2147483648
    %v600 = vor.u32 1.1754944e-38, %v599
    %v601 = vsel %vm598, %v600, %v596
    %v602 = vmul.f32 1.0, %v601
    %v603 = vrcp.pop %v587
    %v604 = vmul.f32 %v587, %v603
    %v605 = vsub.f32 1.0, %v604
    %v606 = vmul.f32 %v603, %v605
    %v607 = vadd.f32 %v603, %v606
    %vm608 = vweird.f32 %v587
    %vm609 = vweird.f32 %v603
    %vm610 = vmor %vm608, %vm609
    %v611 = vsel %vm610, %v603, %v607
    %v612 = vand.u32 2147483647, %v587
    %vm613 = vcmp.eq.f32.partialorder %v612, 8.507059e+37
    %v614 = vand.u32 %v587, 2147483648
    %v615 = vor.u32 1.1754944e-38, %v614
    %v616 = vsel %vm613, %v615, %v611
    %v617 = vmul.f32 1.0, %v616
    %v618 = vtanh.pop %v579
    %v619 = vmul.f32 %v602, %v529
    %621 = vrot.lane.b32.xlu0 %v618, 64
    %v622 = vpop.permute.xlu0 %621
    %v624 = vmul.f32 %v602, %v622
    %626 = vrot.lane.b32.xlu0 %v624, 64
    %v627 = vpop.permute.xlu0 %626
    %v629 = vadd.f32 %v619, %v627
    %v630 = vtanh.pop %v629
    %632 = vrot.lane.b32.xlu0 %v630, 64
    %v633 = vpop.permute.xlu0 %632
    %v635 = vmul.f32 %v617, %v633
    %636 = vst.msk [vmem:[#allocation3 + $0x18] sm:$0xff] %vm335, %v635
    %638 = vrot.lane.b32.xlu0 %v635, 96
    %v639 = vpop.permute.xlu0 %638
    %641 = vst.msk [vmem:[#allocation4 + $0x20] sm:$0xff] %vm335, %v639
    %v642 = vld [vmem:[#allocation2 + $0x40] sm:$0xff]
    %v643 = vld [vmem:[#allocation2 + $0x48] sm:$0xff]
    %v644 = vld [vmem:[#allocation2 + $0x30] sm:$0xff]
    %v645 = vld [vmem:[#allocation2 + $0x38] sm:$0xff]
    %v646 = vsel %vm58, %v642, %v644
    %v647 = vsel %vm59, %v643, %v645
    %v648 = vpack.c.bf16 %v635, %v635
    %v650 = vsel %vm247, %v648, 0
    %652 = vmatpush.bf16.msra.mxu0 0
    %653 = vmatpush.bf16.msra.mxu0 0
    %654 = vmatpush.bf16.msra.mxu0 0
    %655 = vmatpush.bf16.msra.mxu0 0
    %656 = vmatpush.bf16.msra.mxu0 %v237
    %657 = vmatpush.bf16.msra.mxu0 %v235
    %658 = vmatpush.bf16.msra.mxu0 %v233
    %659 = vmatpush.bf16.msra.mxu0 %v231
    %660 = vmatmul.bf16.gmra.mxu0 %v650
    %v661 = vpop.f32.mrf.mxu0
    %v662 = vadd.f32 0.0, %v661
    %v663 = vpop.f32.mrf.mxu0
    %664 = vdwg.mxu0
    %665 = vmatpush.bf16.msra.mxu0 0
    %666 = vmatpush.bf16.msra.mxu0 0
    %667 = vmatpush.bf16.msra.mxu0 0
    %668 = vmatpush.bf16.msra.mxu0 0
    %669 = vmatpush.bf16.msra.mxu0 %v238
    %670 = vmatpush.bf16.msra.mxu0 %v236
    %671 = vmatpush.bf16.msra.mxu0 %v234
    %672 = vmatpush.bf16.msra.mxu0 %v232
    %673 = vmatmul.bf16.gmra.mxu0 %v650
    %v674 = vpop.f32.mrf.mxu0
    %v675 = vadd.f32 0.0, %v674
    %v676 = vpop.f32.mrf.mxu0
    %677 = vdwg.mxu0
    %v678 = vadd.f32 %v646, %v662
    %v679 = vadd.f32 %v647, %v675
    %v680 = vxor.u32 %v678, 2147483648
    %v681 = vxor.u32 %v679, 2147483648
    %v682 = vmul.f32 %v680, 1.442695
    %v683 = vpow.pop %v682
    %v684 = vmul.f32 %v681, 1.442695
    %v685 = vpow.pop %v684
    %v686 = vadd.f32 %v683, 1.0
    %v687 = vadd.f32 %v685, 1.0
    %v688 = vrcp.pop %v686
    %v689 = vmul.f32 %v686, %v688
    %v690 = vsub.f32 1.0, %v689
    %v691 = vmul.f32 %v688, %v690
    %v692 = vadd.f32 %v688, %v691
    %vm693 = vweird.f32 %v686
    %vm694 = vweird.f32 %v688
    %vm695 = vmor %vm693, %vm694
    %v696 = vsel %vm695, %v688, %v692
    %v697 = vand.u32 2147483647, %v686
    %vm698 = vcmp.eq.f32.partialorder %v697, 8.507059e+37
    %v699 = vand.u32 %v686, 2147483648
    %v700 = vor.u32 1.1754944e-38, %v699
    %v701 = vsel %vm698, %v700, %v696
    %v702 = vmul.f32 1.0, %v701
    %v703 = vrcp.pop %v687
    %v704 = vmul.f32 %v687, %v703
    %v705 = vsub.f32 1.0, %v704
    %v706 = vmul.f32 %v703, %v705
    %v707 = vadd.f32 %v703, %v706
    %vm708 = vweird.f32 %v687
    %vm709 = vweird.f32 %v703
    %vm710 = vmor %vm708, %vm709
    %v711 = vsel %vm710, %v703, %v707
    %v712 = vand.u32 2147483647, %v687
    %vm713 = vcmp.eq.f32.partialorder %v712, 8.507059e+37
    %v714 = vand.u32 %v687, 2147483648
    %v715 = vor.u32 1.1754944e-38, %v714
    %v716 = vsel %vm713, %v715, %v711
    %v717 = vmul.f32 1.0, %v716
    %v718 = vtanh.pop %v679
    %v719 = vmul.f32 %v702, %v629
    %721 = vrot.lane.b32.xlu0 %v718, 64
    %v722 = vpop.permute.xlu0 %721
    %v724 = vmul.f32 %v702, %v722
    %726 = vrot.lane.b32.xlu0 %v724, 64
    %v727 = vpop.permute.xlu0 %726
    %v729 = vadd.f32 %v719, %v727
    %v730 = vtanh.pop %v729
    %732 = vrot.lane.b32.xlu0 %v730, 64
    %v733 = vpop.permute.xlu0 %732
    %v735 = vmul.f32 %v717, %v733
    %736 = vst.msk [vmem:[#allocation3 + $0x20] sm:$0xff] %vm335, %v735
    %738 = vrot.lane.b32.xlu0 %v735, 96
    %v739 = vpop.permute.xlu0 %738
    %741 = vst.msk [vmem:[#allocation4 + $0x18] sm:$0xff] %vm335, %v739
    %v742 = vld [vmem:[#allocation2 + $0x50] sm:$0xff]
    %v743 = vld [vmem:[#allocation2 + $0x58] sm:$0xff]
    %v744 = vld [vmem:[#allocation2 + $0x20] sm:$0xff]
    %v745 = vld [vmem:[#allocation2 + $0x28] sm:$0xff]
    %v746 = vsel %vm58, %v742, %v744
    %v747 = vsel %vm59, %v743, %v745
    %v748 = vpack.c.bf16 %v735, %v735
    %v750 = vsel %vm247, %v748, 0
    %752 = vmatpush.bf16.msra.mxu0 0
    %753 = vmatpush.bf16.msra.mxu0 0
    %754 = vmatpush.bf16.msra.mxu0 0
    %755 = vmatpush.bf16.msra.mxu0 0
    %756 = vmatpush.bf16.msra.mxu0 %v237
    %757 = vmatpush.bf16.msra.mxu0 %v235
    %758 = vmatpush.bf16.msra.mxu0 %v233
    %759 = vmatpush.bf16.msra.mxu0 %v231
    %760 = vmatmul.bf16.gmra.mxu0 %v750
    %v761 = vpop.f32.mrf.mxu0
    %v762 = vadd.f32 0.0, %v761
    %v763 = vpop.f32.mrf.mxu0
    %764 = vdwg.mxu0
    %765 = vmatpush.bf16.msra.mxu0 0
    %766 = vmatpush.bf16.msra.mxu0 0
    %767 = vmatpush.bf16.msra.mxu0 0
    %768 = vmatpush.bf16.msra.mxu0 0
    %769 = vmatpush.bf16.msra.mxu0 %v238
    %770 = vmatpush.bf16.msra.mxu0 %v236
    %771 = vmatpush.bf16.msra.mxu0 %v234
    %772 = vmatpush.bf16.msra.mxu0 %v232
    %773 = vmatmul.bf16.gmra.mxu0 %v750
    %v774 = vpop.f32.mrf.mxu0
    %v775 = vadd.f32 0.0, %v774
    %v776 = vpop.f32.mrf.mxu0
    %777 = vdwg.mxu0
    %v778 = vadd.f32 %v746, %v762
    %v779 = vadd.f32 %v747, %v775
    %v780 = vxor.u32 %v778, 2147483648
    %v781 = vxor.u32 %v779, 2147483648
    %v782 = vmul.f32 %v780, 1.442695
    %v783 = vpow.pop %v782
    %v784 = vmul.f32 %v781, 1.442695
    %v785 = vpow.pop %v784
    %v786 = vadd.f32 %v783, 1.0
    %v787 = vadd.f32 %v785, 1.0
    %v788 = vrcp.pop %v786
    %v789 = vmul.f32 %v786, %v788
    %v790 = vsub.f32 1.0, %v789
    %v791 = vmul.f32 %v788, %v790
    %v792 = vadd.f32 %v788, %v791
    %vm793 = vweird.f32 %v786
    %vm794 = vweird.f32 %v788
    %vm795 = vmor %vm793, %vm794
    %v796 = vsel %vm795, %v788, %v792
    %v797 = vand.u32 2147483647, %v786
    %vm798 = vcmp.eq.f32.partialorder %v797, 8.507059e+37
    %v799 = vand.u32 %v786, 2147483648
    %v800 = vor.u32 1.1754944e-38, %v799
    %v801 = vsel %vm798, %v800, %v796
    %v802 = vmul.f32 1.0, %v801
    %v803 = vrcp.pop %v787
    %v804 = vmul.f32 %v787, %v803
    %v805 = vsub.f32 1.0, %v804
    %v806 = vmul.f32 %v803, %v805
    %v807 = vadd.f32 %v803, %v806
    %vm808 = vweird.f32 %v787
    %vm809 = vweird.f32 %v803
    %vm810 = vmor %vm808, %vm809
    %v811 = vsel %vm810, %v803, %v807
    %v812 = vand.u32 2147483647, %v787
    %vm813 = vcmp.eq.f32.partialorder %v812, 8.507059e+37
    %v814 = vand.u32 %v787, 2147483648
    %v815 = vor.u32 1.1754944e-38, %v814
    %v816 = vsel %vm813, %v815, %v811
    %v817 = vmul.f32 1.0, %v816
    %v818 = vtanh.pop %v779
    %v819 = vmul.f32 %v802, %v729
    %821 = vrot.lane.b32.xlu0 %v818, 64
    %v822 = vpop.permute.xlu0 %821
    %v824 = vmul.f32 %v802, %v822
    %826 = vrot.lane.b32.xlu0 %v824, 64
    %v827 = vpop.permute.xlu0 %826
    %v829 = vadd.f32 %v819, %v827
    %v830 = vtanh.pop %v829
    %832 = vrot.lane.b32.xlu0 %v830, 64
    %v833 = vpop.permute.xlu0 %832
    %v835 = vmul.f32 %v817, %v833
    %836 = vst.msk [vmem:[#allocation3 + $0x28] sm:$0xff] %vm335, %v835
    %838 = vrot.lane.b32.xlu0 %v835, 96
    %v839 = vpop.permute.xlu0 %838
    %841 = vst.msk [vmem:[#allocation4 + $0x10] sm:$0xff] %vm335, %v839
    %v842 = vld [vmem:[#allocation2 + $0x60] sm:$0xff]
    %v843 = vld [vmem:[#allocation2 + $0x68] sm:$0xff]
    %v844 = vld [vmem:[#allocation2 + $0x10] sm:$0xff]
    %v845 = vld [vmem:[#allocation2 + $0x18] sm:$0xff]
    %v846 = vsel %vm58, %v842, %v844
    %v847 = vsel %vm59, %v843, %v845
    %v848 = vpack.c.bf16 %v835, %v835
    %v850 = vsel %vm247, %v848, 0
    %852 = vmatpush.bf16.msra.mxu0 0
    %853 = vmatpush.bf16.msra.mxu0 0
    %854 = vmatpush.bf16.msra.mxu0 0
    %855 = vmatpush.bf16.msra.mxu0 0
    %856 = vmatpush.bf16.msra.mxu0 %v237
    %857 = vmatpush.bf16.msra.mxu0 %v235
    %858 = vmatpush.bf16.msra.mxu0 %v233
    %859 = vmatpush.bf16.msra.mxu0 %v231
    %860 = vmatmul.bf16.gmra.mxu0 %v850
    %v861 = vpop.f32.mrf.mxu0
    %v862 = vadd.f32 0.0, %v861
    %v863 = vpop.f32.mrf.mxu0
    %864 = vdwg.mxu0
    %865 = vmatpush.bf16.msra.mxu0 0
    %866 = vmatpush.bf16.msra.mxu0 0
    %867 = vmatpush.bf16.msra.mxu0 0
    %868 = vmatpush.bf16.msra.mxu0 0
    %869 = vmatpush.bf16.msra.mxu0 %v238
    %870 = vmatpush.bf16.msra.mxu0 %v236
    %871 = vmatpush.bf16.msra.mxu0 %v234
    %872 = vmatpush.bf16.msra.mxu0 %v232
    %873 = vmatmul.bf16.gmra.mxu0 %v850
    %v874 = vpop.f32.mrf.mxu0
    %v875 = vadd.f32 0.0, %v874
    %v876 = vpop.f32.mrf.mxu0
    %877 = vdwg.mxu0
    %v878 = vadd.f32 %v846, %v862
    %v879 = vadd.f32 %v847, %v875
    %v880 = vxor.u32 %v878, 2147483648
    %v881 = vxor.u32 %v879, 2147483648
    %v882 = vmul.f32 %v880, 1.442695
    %v883 = vpow.pop %v882
    %v884 = vmul.f32 %v881, 1.442695
    %v885 = vpow.pop %v884
    %v886 = vadd.f32 %v883, 1.0
    %v887 = vadd.f32 %v885, 1.0
    %v888 = vrcp.pop %v886
    %v889 = vmul.f32 %v886, %v888
    %v890 = vsub.f32 1.0, %v889
    %v891 = vmul.f32 %v888, %v890
    %v892 = vadd.f32 %v888, %v891
    %vm893 = vweird.f32 %v886
    %vm894 = vweird.f32 %v888
    %vm895 = vmor %vm893, %vm894
    %v896 = vsel %vm895, %v888, %v892
    %v897 = vand.u32 2147483647, %v886
    %vm898 = vcmp.eq.f32.partialorder %v897, 8.507059e+37
    %v899 = vand.u32 %v886, 2147483648
    %v900 = vor.u32 1.1754944e-38, %v899
    %v901 = vsel %vm898, %v900, %v896
    %v902 = vmul.f32 1.0, %v901
    %v903 = vrcp.pop %v887
    %v904 = vmul.f32 %v887, %v903
    %v905 = vsub.f32 1.0, %v904
    %v906 = vmul.f32 %v903, %v905
    %v907 = vadd.f32 %v903, %v906
    %vm908 = vweird.f32 %v887
    %vm909 = vweird.f32 %v903
    %vm910 = vmor %vm908, %vm909
    %v911 = vsel %vm910, %v903, %v907
    %v912 = vand.u32 2147483647, %v887
    %vm913 = vcmp.eq.f32.partialorder %v912, 8.507059e+37
    %v914 = vand.u32 %v887, 2147483648
    %v915 = vor.u32 1.1754944e-38, %v914
    %v916 = vsel %vm913, %v915, %v911
    %v917 = vmul.f32 1.0, %v916
    %v918 = vtanh.pop %v879
    %v919 = vmul.f32 %v902, %v829
    %921 = vrot.lane.b32.xlu0 %v918, 64
    %v922 = vpop.permute.xlu0 %921
    %v924 = vmul.f32 %v902, %v922
    %926 = vrot.lane.b32.xlu0 %v924, 64
    %v927 = vpop.permute.xlu0 %926
    %v929 = vadd.f32 %v919, %v927
    %v930 = vtanh.pop %v929
    %932 = vrot.lane.b32.xlu0 %v930, 64
    %v933 = vpop.permute.xlu0 %932
    %v935 = vmul.f32 %v917, %v933
    %936 = vst.msk [vmem:[#allocation3 + $0x30] sm:$0xff] %vm335, %v935
    %938 = vrot.lane.b32.xlu0 %v935, 96
    %v939 = vpop.permute.xlu0 %938
    %941 = vst.msk [vmem:[#allocation4 + $0x8] sm:$0xff] %vm335, %v939
    %v942 = vld [vmem:[#allocation2 + $0x70] sm:$0xff]
    %v943 = vld [vmem:[#allocation2 + $0x78] sm:$0xff]
    %v944 = vld [vmem:[#allocation2] sm:$0xff]
    %v945 = vld [vmem:[#allocation2 + $0x8] sm:$0xff]
    %v946 = vsel %vm58, %v942, %v944
    %v947 = vsel %vm59, %v943, %v945
    %v948 = vpack.c.bf16 %v935, %v935
    %v950 = vsel %vm247, %v948, 0
    %952 = vmatpush.bf16.msra.mxu0 0
    %953 = vmatpush.bf16.msra.mxu0 0
    %954 = vmatpush.bf16.msra.mxu0 0
    %955 = vmatpush.bf16.msra.mxu0 0
    %956 = vmatpush.bf16.msra.mxu0 %v237
    %957 = vmatpush.bf16.msra.mxu0 %v235
    %958 = vmatpush.bf16.msra.mxu0 %v233
    %959 = vmatpush.bf16.msra.mxu0 %v231
    %960 = vmatmul.bf16.gmra.mxu0 %v950
    %v961 = vpop.f32.mrf.mxu0
    %v962 = vadd.f32 0.0, %v961
    %v963 = vpop.f32.mrf.mxu0
    %964 = vdwg.mxu0
    %965 = vmatpush.bf16.msra.mxu0 0
    %966 = vmatpush.bf16.msra.mxu0 0
    %967 = vmatpush.bf16.msra.mxu0 0
    %968 = vmatpush.bf16.msra.mxu0 0
    %969 = vmatpush.bf16.msra.mxu0 %v238
    %970 = vmatpush.bf16.msra.mxu0 %v236
    %971 = vmatpush.bf16.msra.mxu0 %v234
    %972 = vmatpush.bf16.msra.mxu0 %v232
    %973 = vmatmul.bf16.gmra.mxu0 %v950
    %v974 = vpop.f32.mrf.mxu0
    %v975 = vadd.f32 0.0, %v974
    %v976 = vpop.f32.mrf.mxu0
    %977 = vdwg.mxu0
    %v978 = vadd.f32 %v946, %v962
    %v979 = vadd.f32 %v947, %v975
    %v980 = vxor.u32 %v978, 2147483648
    %v981 = vxor.u32 %v979, 2147483648
    %v982 = vmul.f32 %v980, 1.442695
    %v983 = vpow.pop %v982
    %v984 = vmul.f32 %v981, 1.442695
    %v985 = vpow.pop %v984
    %v986 = vadd.f32 %v983, 1.0
    %v987 = vadd.f32 %v985, 1.0
    %v988 = vrcp.pop %v986
    %v989 = vmul.f32 %v986, %v988
    %v990 = vsub.f32 1.0, %v989
    %v991 = vmul.f32 %v988, %v990
    %v992 = vadd.f32 %v988, %v991
    %vm993 = vweird.f32 %v986
    %vm994 = vweird.f32 %v988
    %vm995 = vmor %vm993, %vm994
    %v996 = vsel %vm995, %v988, %v992
    %v997 = vand.u32 2147483647, %v986
    %vm998 = vcmp.eq.f32.partialorder %v997, 8.507059e+37
    %v999 = vand.u32 %v986, 2147483648
    %v1000 = vor.u32 1.1754944e-38, %v999
    %v1001 = vsel %vm998, %v1000, %v996
    %v1002 = vmul.f32 1.0, %v1001
    %v1003 = vrcp.pop %v987
    %v1004 = vmul.f32 %v987, %v1003
    %v1005 = vsub.f32 1.0, %v1004
    %v1006 = vmul.f32 %v1003, %v1005
    %v1007 = vadd.f32 %v1003, %v1006
    %vm1008 = vweird.f32 %v987
    %vm1009 = vweird.f32 %v1003
    %vm1010 = vmor %vm1008, %vm1009
    %v1011 = vsel %vm1010, %v1003, %v1007
    %v1012 = vand.u32 2147483647, %v987
    %vm1013 = vcmp.eq.f32.partialorder %v1012, 8.507059e+37
    %v1014 = vand.u32 %v987, 2147483648
    %v1015 = vor.u32 1.1754944e-38, %v1014
    %v1016 = vsel %vm1013, %v1015, %v1011
    %v1017 = vmul.f32 1.0, %v1016
    %v1018 = vtanh.pop %v979
    %v1019 = vmul.f32 %v1002, %v929
    %1021 = vrot.lane.b32.xlu0 %v1018, 64
    %v1022 = vpop.permute.xlu0 %1021
    %v1024 = vmul.f32 %v1002, %v1022
    %1026 = vrot.lane.b32.xlu0 %v1024, 64
    %v1027 = vpop.permute.xlu0 %1026
    %v1029 = vadd.f32 %v1019, %v1027
    %v1030 = vtanh.pop %v1029
    %1032 = vrot.lane.b32.xlu0 %v1030, 64
    %v1033 = vpop.permute.xlu0 %1032
    %v1035 = vmul.f32 %v1017, %v1033
    %1036 = vst.msk [vmem:[#allocation3 + $0x38] sm:$0xff] %vm335, %v1035
    %1038 = vrot.lane.b32.xlu0 %v1035, 96
    %v1039 = vpop.permute.xlu0 %1038
    %1041 = vst.msk [vmem:[#allocation4] sm:$0xff] %vm335, %v1039
    %s1042 = scalar_lea.vmem %s2, 1
    %v1043 = vld [vmem:[%s1042] ss:$8 sm:$0x3]
    %v1044 = vld [vmem:[#allocation5 + $0x50] sm:$0xff]
    %v1045 = vld [vmem:[#allocation5 + $0x58] sm:$0xff]
    %v1046 = vld [vmem:[#allocation5 + $0x60] sm:$0xff]
    %v1047 = vld [vmem:[#allocation5 + $0x68] sm:$0xff]
    %v1048 = vld [vmem:[#allocation3] sm:$0xff]
    %v1049 = vld [vmem:[#allocation3 + $0x8] sm:$0xff]
    %v1050 = vld [vmem:[#allocation3 + $0x10] sm:$0xff]
    %v1051 = vld [vmem:[#allocation3 + $0x18] sm:$0xff]
    %v1052 = vld [vmem:[#allocation3 + $0x20] sm:$0xff]
    %v1053 = vld [vmem:[#allocation3 + $0x28] sm:$0xff]
    %v1054 = vld [vmem:[#allocation3 + $0x30] sm:$0xff]
    %v1055 = vld [vmem:[#allocation3 + $0x38] sm:$0xff]
    %v1056 = vpack.c.bf16 %v1049, %v1048
    %v1057 = vpack.c.bf16 %v1051, %v1050
    %v1058 = vpack.c.bf16 %v1053, %v1052
    %v1059 = vpack.c.bf16 %v1055, %v1054
    %v1060 = vld [vmem:[#allocation5 + $0x70] sm:$0xff]
    %v1061 = vld [vmem:[#allocation5 + $0x78] sm:$0xff]
    %v1062 = vld [vmem:[#allocation5 + $0x80] sm:$0xff]
    %v1063 = vld [vmem:[#allocation5 + $0x88] sm:$0xff]
    %v1064 = vld [vmem:[#allocation4] sm:$0xff]
    %v1065 = vld [vmem:[#allocation4 + $0x8] sm:$0xff]
    %v1066 = vld [vmem:[#allocation4 + $0x10] sm:$0xff]
    %v1067 = vld [vmem:[#allocation4 + $0x18] sm:$0xff]
    %v1068 = vld [vmem:[#allocation4 + $0x20] sm:$0xff]
    %v1069 = vld [vmem:[#allocation4 + $0x28] sm:$0xff]
    %v1070 = vld [vmem:[#allocation4 + $0x30] sm:$0xff]
    %v1071 = vld [vmem:[#allocation4 + $0x38] sm:$0xff]
    %v1072 = vpack.c.bf16 %v1065, %v1064
    %v1073 = vpack.c.bf16 %v1067, %v1066
    %v1074 = vpack.c.bf16 %v1069, %v1068
    %v1075 = vpack.c.bf16 %v1071, %v1070
    %v1080 = vunpack.c.l.b16 %v1060
    %v1081 = vunpack.c.h.b16 %v1060
    %v1082 = vunpack.c.l.b16 %v1061
    %v1083 = vunpack.c.h.b16 %v1061
    %v1084 = vunpack.c.l.b16 %v1062
    %v1085 = vunpack.c.h.b16 %v1062
    %v1086 = vunpack.c.l.b16 %v1063
    %v1087 = vunpack.c.h.b16 %v1063
    %v1088 = vpack.c.b16 %v1082, %v1080
    %v1089 = vpack.c.b16 %v1083, %v1081
    %v1090 = vpack.c.b16 %v1086, %v1084
    %v1091 = vpack.c.b16 %v1087, %v1085
    %v1097 = vsel %vm335, %v1072, 0
    %v1100 = vsel %vm335, %v1073, 0
    %v1103 = vsel %vm335, %v1074, 0
    %v1106 = vsel %vm335, %v1075, 0
    %1108 = vmatpush.bf16.msra.mxu0 0
    %1109 = vmatpush.bf16.msra.mxu0 0
    %1110 = vmatpush.bf16.msra.mxu0 0
    %1111 = vmatpush.bf16.msra.mxu0 0
    %1112 = vmatpush.bf16.msra.mxu0 0
    %1113 = vmatpush.bf16.msra.mxu0 0
    %1114 = vmatpush.bf16.msra.mxu0 %v1090
    %1115 = vmatpush.bf16.msra.mxu0 %v1088
    %1116 = vmatmul.bf16.gmra.mxu0 %v1097
    %v1117 = vpop.f32.mrf.mxu0
    %v1118 = vadd.f32 0.0, %v1117
    %v1119 = vpop.f32.mrf.mxu0
    %v1120 = vadd.f32 0.0, %v1119
    %1121 = vmatmul.bf16.gmra.mxu0 %v1100
    %v1122 = vpop.f32.mrf.mxu0
    %v1123 = vadd.f32 0.0, %v1122
    %v1124 = vpop.f32.mrf.mxu0
    %v1125 = vadd.f32 0.0, %v1124
    %1126 = vmatmul.bf16.gmra.mxu0 %v1103
    %v1127 = vpop.f32.mrf.mxu0
    %v1128 = vadd.f32 0.0, %v1127
    %v1129 = vpop.f32.mrf.mxu0
    %v1130 = vadd.f32 0.0, %v1129
    %1131 = vmatmul.bf16.gmra.mxu0 %v1106
    %v1132 = vpop.f32.mrf.mxu0
    %v1133 = vadd.f32 0.0, %v1132
    %v1134 = vpop.f32.mrf.mxu0
    %v1135 = vadd.f32 0.0, %v1134
    %1136 = vdwg.mxu0
    %1137 = vmatpush.bf16.msra.mxu0 0
    %1138 = vmatpush.bf16.msra.mxu0 0
    %1139 = vmatpush.bf16.msra.mxu0 0
    %1140 = vmatpush.bf16.msra.mxu0 0
    %1141 = vmatpush.bf16.msra.mxu0 0
    %1142 = vmatpush.bf16.msra.mxu0 0
    %1143 = vmatpush.bf16.msra.mxu0 %v1091
    %1144 = vmatpush.bf16.msra.mxu0 %v1089
    %1145 = vmatmul.bf16.gmra.mxu0 %v1097
    %v1146 = vpop.f32.mrf.mxu0
    %v1147 = vadd.f32 0.0, %v1146
    %v1148 = vpop.f32.mrf.mxu0
    %v1149 = vadd.f32 0.0, %v1148
    %1150 = vmatmul.bf16.gmra.mxu0 %v1100
    %v1151 = vpop.f32.mrf.mxu0
    %v1152 = vadd.f32 0.0, %v1151
    %v1153 = vpop.f32.mrf.mxu0
    %v1154 = vadd.f32 0.0, %v1153
    %1155 = vmatmul.bf16.gmra.mxu0 %v1103
    %v1156 = vpop.f32.mrf.mxu0
    %v1157 = vadd.f32 0.0, %v1156
    %v1158 = vpop.f32.mrf.mxu0
    %v1159 = vadd.f32 0.0, %v1158
    %1160 = vmatmul.bf16.gmra.mxu0 %v1106
    %v1161 = vpop.f32.mrf.mxu0
    %v1162 = vadd.f32 0.0, %v1161
    %v1163 = vpop.f32.mrf.mxu0
    %v1164 = vadd.f32 0.0, %v1163
    %1165 = vdwg.mxu0
    %v1170 = vunpack.c.l.b16 %v1044
    %v1171 = vunpack.c.h.b16 %v1044
    %v1172 = vunpack.c.l.b16 %v1045
    %v1173 = vunpack.c.h.b16 %v1045
    %v1174 = vunpack.c.l.b16 %v1046
    %v1175 = vunpack.c.h.b16 %v1046
    %v1176 = vunpack.c.l.b16 %v1047
    %v1177 = vunpack.c.h.b16 %v1047
    %v1178 = vpack.c.b16 %v1172, %v1170
    %v1179 = vpack.c.b16 %v1173, %v1171
    %v1180 = vpack.c.b16 %v1176, %v1174
    %v1181 = vpack.c.b16 %v1177, %v1175
    %v1187 = vsel %vm335, %v1056, 0
    %v1190 = vsel %vm335, %v1057, 0
    %v1193 = vsel %vm335, %v1058, 0
    %v1196 = vsel %vm335, %v1059, 0
    %1198 = vmatpush.bf16.msra.mxu0 0
    %1199 = vmatpush.bf16.msra.mxu0 0
    %1200 = vmatpush.bf16.msra.mxu0 0
    %1201 = vmatpush.bf16.msra.mxu0 0
    %1202 = vmatpush.bf16.msra.mxu0 0
    %1203 = vmatpush.bf16.msra.mxu0 0
    %1204 = vmatpush.bf16.msra.mxu0 %v1180
    %1205 = vmatpush.bf16.msra.mxu0 %v1178
    %1206 = vmatmul.bf16.gmra.mxu0 %v1187
    %v1207 = vpop.f32.mrf.mxu0
    %v1208 = vadd.f32 %v1118, %v1207
    %v1209 = vpop.f32.mrf.mxu0
    %v1210 = vadd.f32 %v1120, %v1209
    %1211 = vmatmul.bf16.gmra.mxu0 %v1190
    %v1212 = vpop.f32.mrf.mxu0
    %v1213 = vadd.f32 %v1123, %v1212
    %v1214 = vpop.f32.mrf.mxu0
    %v1215 = vadd.f32 %v1125, %v1214
    %1216 = vmatmul.bf16.gmra.mxu0 %v1193
    %v1217 = vpop.f32.mrf.mxu0
    %v1218 = vadd.f32 %v1128, %v1217
    %v1219 = vpop.f32.mrf.mxu0
    %v1220 = vadd.f32 %v1130, %v1219
    %1221 = vmatmul.bf16.gmra.mxu0 %v1196
    %v1222 = vpop.f32.mrf.mxu0
    %v1223 = vadd.f32 %v1133, %v1222
    %v1224 = vpop.f32.mrf.mxu0
    %v1225 = vadd.f32 %v1135, %v1224
    %1226 = vdwg.mxu0
    %1227 = vmatpush.bf16.msra.mxu0 0
    %1228 = vmatpush.bf16.msra.mxu0 0
    %1229 = vmatpush.bf16.msra.mxu0 0
    %1230 = vmatpush.bf16.msra.mxu0 0
    %1231 = vmatpush.bf16.msra.mxu0 0
    %1232 = vmatpush.bf16.msra.mxu0 0
    %1233 = vmatpush.bf16.msra.mxu0 %v1181
    %1234 = vmatpush.bf16.msra.mxu0 %v1179
    %1235 = vmatmul.bf16.gmra.mxu0 %v1187
    %v1236 = vpop.f32.mrf.mxu0
    %v1237 = vadd.f32 %v1147, %v1236
    %v1238 = vpop.f32.mrf.mxu0
    %v1239 = vadd.f32 %v1149, %v1238
    %1240 = vmatmul.bf16.gmra.mxu0 %v1190
    %v1241 = vpop.f32.mrf.mxu0
    %v1242 = vadd.f32 %v1152, %v1241
    %v1243 = vpop.f32.mrf.mxu0
    %v1244 = vadd.f32 %v1154, %v1243
    %1245 = vmatmul.bf16.gmra.mxu0 %v1193
    %v1246 = vpop.f32.mrf.mxu0
    %v1247 = vadd.f32 %v1157, %v1246
    %v1248 = vpop.f32.mrf.mxu0
    %v1249 = vadd.f32 %v1159, %v1248
    %1250 = vmatmul.bf16.gmra.mxu0 %v1196
    %v1251 = vpop.f32.mrf.mxu0
    %v1252 = vadd.f32 %v1162, %v1251
    %v1253 = vpop.f32.mrf.mxu0
    %v1254 = vadd.f32 %v1164, %v1253
    %1255 = vdwg.mxu0
    %v1257 = vperm.slane %v1043, 0
    %v1258 = vperm.slane %v1043, 1
    %v1261 = vadd.f32 %v1208, %v1257
    %v1262 = vadd.f32 %v1237, %v1258
    %v1263 = vadd.f32 %v1210, %v1257
    %v1264 = vadd.f32 %v1239, %v1258
    %v1265 = vadd.f32 %v1213, %v1257
    %v1266 = vadd.f32 %v1242, %v1258
    %v1267 = vadd.f32 %v1215, %v1257
    %v1268 = vadd.f32 %v1244, %v1258
    %v1269 = vadd.f32 %v1218, %v1257
    %v1270 = vadd.f32 %v1247, %v1258
    %v1271 = vadd.f32 %v1220, %v1257
    %v1272 = vadd.f32 %v1249, %v1258
    %v1273 = vadd.f32 %v1223, %v1257
    %v1274 = vadd.f32 %v1252, %v1258
    %v1275 = vadd.f32 %v1225, %v1257
    %v1276 = vadd.f32 %v1254, %v1258
    %1277 = vst [vmem:[#allocation2] sm:$0xff] %v1261
    %1278 = vst [vmem:[#allocation2 + $0x8] sm:$0xff] %v1262
    %1279 = vst [vmem:[#allocation2 + $0x10] sm:$0xff] %v1263
    %1280 = vst [vmem:[#allocation2 + $0x18] sm:$0xff] %v1264
    %1281 = vst [vmem:[#allocation2 + $0x20] sm:$0xff] %v1265
    %1282 = vst [vmem:[#allocation2 + $0x28] sm:$0xff] %v1266
    %1283 = vst [vmem:[#allocation2 + $0x30] sm:$0xff] %v1267
    %1284 = vst [vmem:[#allocation2 + $0x38] sm:$0xff] %v1268
    %1285 = vst [vmem:[#allocation2 + $0x40] sm:$0xff] %v1269
    %1286 = vst [vmem:[#allocation2 + $0x48] sm:$0xff] %v1270
    %1287 = vst [vmem:[#allocation2 + $0x50] sm:$0xff] %v1271
    %1288 = vst [vmem:[#allocation2 + $0x58] sm:$0xff] %v1272
    %1289 = vst [vmem:[#allocation2 + $0x60] sm:$0xff] %v1273
    %1290 = vst [vmem:[#allocation2 + $0x68] sm:$0xff] %v1274
    %1291 = vst [vmem:[#allocation2 + $0x70] sm:$0xff] %v1275
    %1292 = vst [vmem:[#allocation2 + $0x78] sm:$0xff] %v1276
    %v1293 = vld [vmem:[#allocation5 + $0x90] sm:$0xff]
    %v1294 = vld [vmem:[#allocation5 + $0x98] sm:$0xff]
    %v1295 = vld [vmem:[#allocation5 + $0xa0] sm:$0xff]
    %v1296 = vld [vmem:[#allocation5 + $0xa8] sm:$0xff]
    %v1297 = vld [vmem:[#allocation5 + $0xb0] sm:$0xff]
    %v1298 = vld [vmem:[#allocation5 + $0xb8] sm:$0xff]
    %v1299 = vld [vmem:[#allocation5 + $0xc0] sm:$0xff]
    %v1300 = vld [vmem:[#allocation5 + $0xc8] sm:$0xff]
    %v1301 = vld [vmem:[#allocation2] sm:$0xff]
    %v1302 = vld [vmem:[#allocation2 + $0x8] sm:$0xff]
    %v1303 = vld [vmem:[#allocation2 + $0x70] sm:$0xff]
    %v1304 = vld [vmem:[#allocation2 + $0x78] sm:$0xff]
    %v1305 = vsel %vm58, %v1301, %v1303
    %v1306 = vsel %vm59, %v1302, %v1304
    %v1315 = vunpack.c.l.b16 %v1293
    %v1316 = vunpack.c.h.b16 %v1293
    %v1317 = vunpack.c.l.b16 %v1294
    %v1318 = vunpack.c.h.b16 %v1294
    %v1319 = vunpack.c.l.b16 %v1295
    %v1320 = vunpack.c.h.b16 %v1295
    %v1321 = vunpack.c.l.b16 %v1296
    %v1322 = vunpack.c.h.b16 %v1296
    %v1323 = vunpack.c.l.b16 %v1297
    %v1324 = vunpack.c.h.b16 %v1297
    %v1325 = vunpack.c.l.b16 %v1298
    %v1326 = vunpack.c.h.b16 %v1298
    %v1327 = vunpack.c.l.b16 %v1299
    %v1328 = vunpack.c.h.b16 %v1299
    %v1329 = vunpack.c.l.b16 %v1300
    %v1330 = vunpack.c.h.b16 %v1300
    %v1331 = vpack.c.b16 %v1317, %v1315
    %v1332 = vpack.c.b16 %v1318, %v1316
    %v1333 = vpack.c.b16 %v1321, %v1319
    %v1334 = vpack.c.b16 %v1322, %v1320
    %v1335 = vpack.c.b16 %v1325, %v1323
    %v1336 = vpack.c.b16 %v1326, %v1324
    %v1337 = vpack.c.b16 %v1329, %v1327
    %v1338 = vpack.c.b16 %v1330, %v1328
    %1347 = vmatpush.bf16.msra.mxu0 0
    %1348 = vmatpush.bf16.msra.mxu0 0
    %1349 = vmatpush.bf16.msra.mxu0 0
    %1350 = vmatpush.bf16.msra.mxu0 0
    %1351 = vmatpush.bf16.msra.mxu0 %v1337
    %1352 = vmatpush.bf16.msra.mxu0 %v1335
    %1353 = vmatpush.bf16.msra.mxu0 %v1333
    %1354 = vmatpush.bf16.msra.mxu0 %v1331
    %1355 = vmatmul.bf16.gmra.mxu0 %v249
    %v1356 = vpop.f32.mrf.mxu0
    %v1357 = vadd.f32 0.0, %v1356
    %v1358 = vpop.f32.mrf.mxu0
    %1359 = vdwg.mxu0
    %1360 = vmatpush.bf16.msra.mxu0 0
    %1361 = vmatpush.bf16.msra.mxu0 0
    %1362 = vmatpush.bf16.msra.mxu0 0
    %1363 = vmatpush.bf16.msra.mxu0 0
    %1364 = vmatpush.bf16.msra.mxu0 %v1338
    %1365 = vmatpush.bf16.msra.mxu0 %v1336
    %1366 = vmatpush.bf16.msra.mxu0 %v1334
    %1367 = vmatpush.bf16.msra.mxu0 %v1332
    %1368 = vmatmul.bf16.gmra.mxu0 %v249
    %v1369 = vpop.f32.mrf.mxu0
    %v1370 = vadd.f32 0.0, %v1369
    %v1371 = vpop.f32.mrf.mxu0
    %1372 = vdwg.mxu0
    %v1373 = vadd.f32 %v1305, %v1357
    %v1374 = vadd.f32 %v1306, %v1370
    %v1375 = vxor.u32 %v1373, 2147483648
    %v1376 = vxor.u32 %v1374, 2147483648
    %v1377 = vmul.f32 %v1375, 1.442695
    %v1378 = vpow.pop %v1377
    %v1379 = vmul.f32 %v1376, 1.442695
    %v1380 = vpow.pop %v1379
    %v1381 = vadd.f32 %v1378, 1.0
    %v1382 = vadd.f32 %v1380, 1.0
    %v1383 = vrcp.pop %v1381
    %v1384 = vmul.f32 %v1381, %v1383
    %v1385 = vsub.f32 1.0, %v1384
    %v1386 = vmul.f32 %v1383, %v1385
    %v1387 = vadd.f32 %v1383, %v1386
    %vm1388 = vweird.f32 %v1381
    %vm1389 = vweird.f32 %v1383
    %vm1390 = vmor %vm1388, %vm1389
    %v1391 = vsel %vm1390, %v1383, %v1387
    %v1392 = vand.u32 2147483647, %v1381
    %vm1393 = vcmp.eq.f32.partialorder %v1392, 8.507059e+37
    %v1394 = vand.u32 %v1381, 2147483648
    %v1395 = vor.u32 1.1754944e-38, %v1394
    %v1396 = vsel %vm1393, %v1395, %v1391
    %v1397 = vmul.f32 1.0, %v1396
    %v1398 = vrcp.pop %v1382
    %v1399 = vmul.f32 %v1382, %v1398
    %v1400 = vsub.f32 1.0, %v1399
    %v1401 = vmul.f32 %v1398, %v1400
    %v1402 = vadd.f32 %v1398, %v1401
    %vm1403 = vweird.f32 %v1382
    %vm1404 = vweird.f32 %v1398
    %vm1405 = vmor %vm1403, %vm1404
    %v1406 = vsel %vm1405, %v1398, %v1402
    %v1407 = vand.u32 2147483647, %v1382
    %vm1408 = vcmp.eq.f32.partialorder %v1407, 8.507059e+37
    %v1409 = vand.u32 %v1382, 2147483648
    %v1410 = vor.u32 1.1754944e-38, %v1409
    %v1411 = vsel %vm1408, %v1410, %v1406
    %v1412 = vmul.f32 1.0, %v1411
    %v1413 = vtanh.pop %v1374
    %v1414 = vmul.f32 %v1397, 0.0
    %1416 = vrot.lane.b32.xlu0 %v1413, 64
    %v1417 = vpop.permute.xlu0 %1416
    %v1419 = vmul.f32 %v1397, %v1417
    %1421 = vrot.lane.b32.xlu0 %v1419, 64
    %v1422 = vpop.permute.xlu0 %1421
    %v1424 = vadd.f32 %v1414, %v1422
    %v1425 = vtanh.pop %v1424
    %1427 = vrot.lane.b32.xlu0 %v1425, 64
    %v1428 = vpop.permute.xlu0 %1427
    %v1430 = vmul.f32 %v1412, %v1428
    %v1431 = vld [vmem:[#allocation2 + $0x10] sm:$0xff]
    %v1432 = vld [vmem:[#allocation2 + $0x18] sm:$0xff]
    %v1433 = vld [vmem:[#allocation2 + $0x60] sm:$0xff]
    %v1434 = vld [vmem:[#allocation2 + $0x68] sm:$0xff]
    %v1435 = vsel %vm58, %v1431, %v1433
    %v1436 = vsel %vm59, %v1432, %v1434
    %v1437 = vpack.c.bf16 %v1430, %v1430
    %v1439 = vsel %vm247, %v1437, 0
    %1441 = vmatpush.bf16.msra.mxu0 0
    %1442 = vmatpush.bf16.msra.mxu0 0
    %1443 = vmatpush.bf16.msra.mxu0 0
    %1444 = vmatpush.bf16.msra.mxu0 0
    %1445 = vmatpush.bf16.msra.mxu0 %v1337
    %1446 = vmatpush.bf16.msra.mxu0 %v1335
    %1447 = vmatpush.bf16.msra.mxu0 %v1333
    %1448 = vmatpush.bf16.msra.mxu0 %v1331
    %1449 = vmatmul.bf16.gmra.mxu0 %v1439
    %v1450 = vpop.f32.mrf.mxu0
    %v1451 = vadd.f32 0.0, %v1450
    %v1452 = vpop.f32.mrf.mxu0
    %1453 = vdwg.mxu0
    %1454 = vmatpush.bf16.msra.mxu0 0
    %1455 = vmatpush.bf16.msra.mxu0 0
    %1456 = vmatpush.bf16.msra.mxu0 0
    %1457 = vmatpush.bf16.msra.mxu0 0
    %1458 = vmatpush.bf16.msra.mxu0 %v1338
    %1459 = vmatpush.bf16.msra.mxu0 %v1336
    %1460 = vmatpush.bf16.msra.mxu0 %v1334
    %1461 = vmatpush.bf16.msra.mxu0 %v1332
    %1462 = vmatmul.bf16.gmra.mxu0 %v1439
    %v1463 = vpop.f32.mrf.mxu0
    %v1464 = vadd.f32 0.0, %v1463
    %v1465 = vpop.f32.mrf.mxu0
    %1466 = vdwg.mxu0
    %v1467 = vadd.f32 %v1435, %v1451
    %v1468 = vadd.f32 %v1436, %v1464
    %v1469 = vxor.u32 %v1467, 2147483648
    %v1470 = vxor.u32 %v1468, 2147483648
    %v1471 = vmul.f32 %v1469, 1.442695
    %v1472 = vpow.pop %v1471
    %v1473 = vmul.f32 %v1470, 1.442695
    %v1474 = vpow.pop %v1473
    %v1475 = vadd.f32 %v1472, 1.0
    %v1476 = vadd.f32 %v1474, 1.0
    %v1477 = vrcp.pop %v1475
    %v1478 = vmul.f32 %v1475, %v1477
    %v1479 = vsub.f32 1.0, %v1478
    %v1480 = vmul.f32 %v1477, %v1479
    %v1481 = vadd.f32 %v1477, %v1480
    %vm1482 = vweird.f32 %v1475
    %vm1483 = vweird.f32 %v1477
    %vm1484 = vmor %vm1482, %vm1483
    %v1485 = vsel %vm1484, %v1477, %v1481
    %v1486 = vand.u32 2147483647, %v1475
    %vm1487 = vcmp.eq.f32.partialorder %v1486, 8.507059e+37
    %v1488 = vand.u32 %v1475, 2147483648
    %v1489 = vor.u32 1.1754944e-38, %v1488
    %v1490 = vsel %vm1487, %v1489, %v1485
    %v1491 = vmul.f32 1.0, %v1490
    %v1492 = vrcp.pop %v1476
    %v1493 = vmul.f32 %v1476, %v1492
    %v1494 = vsub.f32 1.0, %v1493
    %v1495 = vmul.f32 %v1492, %v1494
    %v1496 = vadd.f32 %v1492, %v1495
    %vm1497 = vweird.f32 %v1476
    %vm1498 = vweird.f32 %v1492
    %vm1499 = vmor %vm1497, %vm1498
    %v1500 = vsel %vm1499, %v1492, %v1496
    %v1501 = vand.u32 2147483647, %v1476
    %vm1502 = vcmp.eq.f32.partialorder %v1501, 8.507059e+37
    %v1503 = vand.u32 %v1476, 2147483648
    %v1504 = vor.u32 1.1754944e-38, %v1503
    %v1505 = vsel %vm1502, %v1504, %v1500
    %v1506 = vmul.f32 1.0, %v1505
    %v1507 = vtanh.pop %v1468
    %v1508 = vmul.f32 %v1491, %v1424
    %1510 = vrot.lane.b32.xlu0 %v1507, 64
    %v1511 = vpop.permute.xlu0 %1510
    %v1513 = vmul.f32 %v1491, %v1511
    %1515 = vrot.lane.b32.xlu0 %v1513, 64
    %v1516 = vpop.permute.xlu0 %1515
    %v1518 = vadd.f32 %v1508, %v1516
    %v1519 = vtanh.pop %v1518
    %1521 = vrot.lane.b32.xlu0 %v1519, 64
    %v1522 = vpop.permute.xlu0 %1521
    %v1524 = vmul.f32 %v1506, %v1522
    %v1525 = vld [vmem:[#allocation2 + $0x20] sm:$0xff]
    %v1526 = vld [vmem:[#allocation2 + $0x28] sm:$0xff]
    %v1527 = vld [vmem:[#allocation2 + $0x50] sm:$0xff]
    %v1528 = vld [vmem:[#allocation2 + $0x58] sm:$0xff]
    %v1529 = vsel %vm58, %v1525, %v1527
    %v1530 = vsel %vm59, %v1526, %v1528
    %v1531 = vpack.c.bf16 %v1524, %v1524
    %v1533 = vsel %vm247, %v1531, 0
    %1535 = vmatpush.bf16.msra.mxu0 0
    %1536 = vmatpush.bf16.msra.mxu0 0
    %1537 = vmatpush.bf16.msra.mxu0 0
    %1538 = vmatpush.bf16.msra.mxu0 0
    %1539 = vmatpush.bf16.msra.mxu0 %v1337
    %1540 = vmatpush.bf16.msra.mxu0 %v1335
    %1541 = vmatpush.bf16.msra.mxu0 %v1333
    %1542 = vmatpush.bf16.msra.mxu0 %v1331
    %1543 = vmatmul.bf16.gmra.mxu0 %v1533
    %v1544 = vpop.f32.mrf.mxu0
    %v1545 = vadd.f32 0.0, %v1544
    %v1546 = vpop.f32.mrf.mxu0
    %1547 = vdwg.mxu0
    %1548 = vmatpush.bf16.msra.mxu0 0
    %1549 = vmatpush.bf16.msra.mxu0 0
    %1550 = vmatpush.bf16.msra.mxu0 0
    %1551 = vmatpush.bf16.msra.mxu0 0
    %1552 = vmatpush.bf16.msra.mxu0 %v1338
    %1553 = vmatpush.bf16.msra.mxu0 %v1336
    %1554 = vmatpush.bf16.msra.mxu0 %v1334
    %1555 = vmatpush.bf16.msra.mxu0 %v1332
    %1556 = vmatmul.bf16.gmra.mxu0 %v1533
    %v1557 = vpop.f32.mrf.mxu0
    %v1558 = vadd.f32 0.0, %v1557
    %v1559 = vpop.f32.mrf.mxu0
    %1560 = vdwg.mxu0
    %v1561 = vadd.f32 %v1529, %v1545
    %v1562 = vadd.f32 %v1530, %v1558
    %v1563 = vxor.u32 %v1561, 2147483648
    %v1564 = vxor.u32 %v1562, 2147483648
    %v1565 = vmul.f32 %v1563, 1.442695
    %v1566 = vpow.pop %v1565
    %v1567 = vmul.f32 %v1564, 1.442695
    %v1568 = vpow.pop %v1567
    %v1569 = vadd.f32 %v1566, 1.0
    %v1570 = vadd.f32 %v1568, 1.0
    %v1571 = vrcp.pop %v1569
    %v1572 = vmul.f32 %v1569, %v1571
    %v1573 = vsub.f32 1.0, %v1572
    %v1574 = vmul.f32 %v1571, %v1573
    %v1575 = vadd.f32 %v1571, %v1574
    %vm1576 = vweird.f32 %v1569
    %vm1577 = vweird.f32 %v1571
    %vm1578 = vmor %vm1576, %vm1577
    %v1579 = vsel %vm1578, %v1571, %v1575
    %v1580 = vand.u32 2147483647, %v1569
    %vm1581 = vcmp.eq.f32.partialorder %v1580, 8.507059e+37
    %v1582 = vand.u32 %v1569, 2147483648
    %v1583 = vor.u32 1.1754944e-38, %v1582
    %v1584 = vsel %vm1581, %v1583, %v1579
    %v1585 = vmul.f32 1.0, %v1584
    %v1586 = vrcp.pop %v1570
    %v1587 = vmul.f32 %v1570, %v1586
    %v1588 = vsub.f32 1.0, %v1587
    %v1589 = vmul.f32 %v1586, %v1588
    %v1590 = vadd.f32 %v1586, %v1589
    %vm1591 = vweird.f32 %v1570
    %vm1592 = vweird.f32 %v1586
    %vm1593 = vmor %vm1591, %vm1592
    %v1594 = vsel %vm1593, %v1586, %v1590
    %v1595 = vand.u32 2147483647, %v1570
    %vm1596 = vcmp.eq.f32.partialorder %v1595, 8.507059e+37
    %v1597 = vand.u32 %v1570, 2147483648
    %v1598 = vor.u32 1.1754944e-38, %v1597
    %v1599 = vsel %vm1596, %v1598, %v1594
    %v1600 = vmul.f32 1.0, %v1599
    %v1601 = vtanh.pop %v1562
    %v1602 = vmul.f32 %v1585, %v1518
    %1604 = vrot.lane.b32.xlu0 %v1601, 64
    %v1605 = vpop.permute.xlu0 %1604
    %v1607 = vmul.f32 %v1585, %v1605
    %1609 = vrot.lane.b32.xlu0 %v1607, 64
    %v1610 = vpop.permute.xlu0 %1609
    %v1612 = vadd.f32 %v1602, %v1610
    %v1613 = vtanh.pop %v1612
    %1615 = vrot.lane.b32.xlu0 %v1613, 64
    %v1616 = vpop.permute.xlu0 %1615
    %v1618 = vmul.f32 %v1600, %v1616
    %v1619 = vld [vmem:[#allocation2 + $0x30] sm:$0xff]
    %v1620 = vld [vmem:[#allocation2 + $0x38] sm:$0xff]
    %v1621 = vld [vmem:[#allocation2 + $0x40] sm:$0xff]
    %v1622 = vld [vmem:[#allocation2 + $0x48] sm:$0xff]
    %v1623 = vsel %vm58, %v1619, %v1621
    %v1624 = vsel %vm59, %v1620, %v1622
    %v1625 = vpack.c.bf16 %v1618, %v1618
    %v1627 = vsel %vm247, %v1625, 0
    %1629 = vmatpush.bf16.msra.mxu0 0
    %1630 = vmatpush.bf16.msra.mxu0 0
    %1631 = vmatpush.bf16.msra.mxu0 0
    %1632 = vmatpush.bf16.msra.mxu0 0
    %1633 = vmatpush.bf16.msra.mxu0 %v1337
    %1634 = vmatpush.bf16.msra.mxu0 %v1335
    %1635 = vmatpush.bf16.msra.mxu0 %v1333
    %1636 = vmatpush.bf16.msra.mxu0 %v1331
    %1637 = vmatmul.bf16.gmra.mxu0 %v1627
    %v1638 = vpop.f32.mrf.mxu0
    %v1639 = vadd.f32 0.0, %v1638
    %v1640 = vpop.f32.mrf.mxu0
    %1641 = vdwg.mxu0
    %1642 = vmatpush.bf16.msra.mxu0 0
    %1643 = vmatpush.bf16.msra.mxu0 0
    %1644 = vmatpush.bf16.msra.mxu0 0
    %1645 = vmatpush.bf16.msra.mxu0 0
    %1646 = vmatpush.bf16.msra.mxu0 %v1338
    %1647 = vmatpush.bf16.msra.mxu0 %v1336
    %1648 = vmatpush.bf16.msra.mxu0 %v1334
    %1649 = vmatpush.bf16.msra.mxu0 %v1332
    %1650 = vmatmul.bf16.gmra.mxu0 %v1627
    %v1651 = vpop.f32.mrf.mxu0
    %v1652 = vadd.f32 0.0, %v1651
    %v1653 = vpop.f32.mrf.mxu0
    %1654 = vdwg.mxu0
    %v1655 = vadd.f32 %v1623, %v1639
    %v1656 = vadd.f32 %v1624, %v1652
    %v1657 = vxor.u32 %v1655, 2147483648
    %v1658 = vxor.u32 %v1656, 2147483648
    %v1659 = vmul.f32 %v1657, 1.442695
    %v1660 = vpow.pop %v1659
    %v1661 = vmul.f32 %v1658, 1.442695
    %v1662 = vpow.pop %v1661
    %v1663 = vadd.f32 %v1660, 1.0
    %v1664 = vadd.f32 %v1662, 1.0
    %v1665 = vrcp.pop %v1663
    %v1666 = vmul.f32 %v1663, %v1665
    %v1667 = vsub.f32 1.0, %v1666
    %v1668 = vmul.f32 %v1665, %v1667
    %v1669 = vadd.f32 %v1665, %v1668
    %vm1670 = vweird.f32 %v1663
    %vm1671 = vweird.f32 %v1665
    %vm1672 = vmor %vm1670, %vm1671
    %v1673 = vsel %vm1672, %v1665, %v1669
    %v1674 = vand.u32 2147483647, %v1663
    %vm1675 = vcmp.eq.f32.partialorder %v1674, 8.507059e+37
    %v1676 = vand.u32 %v1663, 2147483648
    %v1677 = vor.u32 1.1754944e-38, %v1676
    %v1678 = vsel %vm1675, %v1677, %v1673
    %v1679 = vmul.f32 1.0, %v1678
    %v1680 = vrcp.pop %v1664
    %v1681 = vmul.f32 %v1664, %v1680
    %v1682 = vsub.f32 1.0, %v1681
    %v1683 = vmul.f32 %v1680, %v1682
    %v1684 = vadd.f32 %v1680, %v1683
    %vm1685 = vweird.f32 %v1664
    %vm1686 = vweird.f32 %v1680
    %vm1687 = vmor %vm1685, %vm1686
    %v1688 = vsel %vm1687, %v1680, %v1684
    %v1689 = vand.u32 2147483647, %v1664
    %vm1690 = vcmp.eq.f32.partialorder %v1689, 8.507059e+37
    %v1691 = vand.u32 %v1664, 2147483648
    %v1692 = vor.u32 1.1754944e-38, %v1691
    %v1693 = vsel %vm1690, %v1692, %v1688
    %v1694 = vmul.f32 1.0, %v1693
    %v1695 = vtanh.pop %v1656
    %v1696 = vmul.f32 %v1679, %v1612
    %1698 = vrot.lane.b32.xlu0 %v1695, 64
    %v1699 = vpop.permute.xlu0 %1698
    %v1701 = vmul.f32 %v1679, %v1699
    %1703 = vrot.lane.b32.xlu0 %v1701, 64
    %v1704 = vpop.permute.xlu0 %1703
    %v1706 = vadd.f32 %v1696, %v1704
    %v1707 = vtanh.pop %v1706
    %1709 = vrot.lane.b32.xlu0 %v1707, 64
    %v1710 = vpop.permute.xlu0 %1709
    %v1712 = vmul.f32 %v1694, %v1710
    %v1713 = vsel %vm58, %v1621, %v1619
    %v1714 = vsel %vm59, %v1622, %v1620
    %v1715 = vpack.c.bf16 %v1712, %v1712
    %v1717 = vsel %vm247, %v1715, 0
    %1719 = vmatpush.bf16.msra.mxu0 0
    %1720 = vmatpush.bf16.msra.mxu0 0
    %1721 = vmatpush.bf16.msra.mxu0 0
    %1722 = vmatpush.bf16.msra.mxu0 0
    %1723 = vmatpush.bf16.msra.mxu0 %v1337
    %1724 = vmatpush.bf16.msra.mxu0 %v1335
    %1725 = vmatpush.bf16.msra.mxu0 %v1333
    %1726 = vmatpush.bf16.msra.mxu0 %v1331
    %1727 = vmatmul.bf16.gmra.mxu0 %v1717
    %v1728 = vpop.f32.mrf.mxu0
    %v1729 = vadd.f32 0.0, %v1728
    %v1730 = vpop.f32.mrf.mxu0
    %1731 = vdwg.mxu0
    %1732 = vmatpush.bf16.msra.mxu0 0
    %1733 = vmatpush.bf16.msra.mxu0 0
    %1734 = vmatpush.bf16.msra.mxu0 0
    %1735 = vmatpush.bf16.msra.mxu0 0
    %1736 = vmatpush.bf16.msra.mxu0 %v1338
    %1737 = vmatpush.bf16.msra.mxu0 %v1336
    %1738 = vmatpush.bf16.msra.mxu0 %v1334
    %1739 = vmatpush.bf16.msra.mxu0 %v1332
    %1740 = vmatmul.bf16.gmra.mxu0 %v1717
    %v1741 = vpop.f32.mrf.mxu0
    %v1742 = vadd.f32 0.0, %v1741
    %v1743 = vpop.f32.mrf.mxu0
    %1744 = vdwg.mxu0
    %v1745 = vadd.f32 %v1713, %v1729
    %v1746 = vadd.f32 %v1714, %v1742
    %v1747 = vxor.u32 %v1745, 2147483648
    %v1748 = vxor.u32 %v1746, 2147483648
    %v1749 = vmul.f32 %v1747, 1.442695
    %v1750 = vpow.pop %v1749
    %v1751 = vmul.f32 %v1748, 1.442695
    %v1752 = vpow.pop %v1751
    %v1753 = vadd.f32 %v1750, 1.0
    %v1754 = vadd.f32 %v1752, 1.0
    %v1755 = vrcp.pop %v1753
    %v1756 = vmul.f32 %v1753, %v1755
    %v1757 = vsub.f32 1.0, %v1756
    %v1758 = vmul.f32 %v1755, %v1757
    %v1759 = vadd.f32 %v1755, %v1758
    %vm1760 = vweird.f32 %v1753
    %vm1761 = vweird.f32 %v1755
    %vm1762 = vmor %vm1760, %vm1761
    %v1763 = vsel %vm1762, %v1755, %v1759
    %v1764 = vand.u32 2147483647, %v1753
    %vm1765 = vcmp.eq.f32.partialorder %v1764, 8.507059e+37
    %v1766 = vand.u32 %v1753, 2147483648
    %v1767 = vor.u32 1.1754944e-38, %v1766
    %v1768 = vsel %vm1765, %v1767, %v1763
    %v1769 = vmul.f32 1.0, %v1768
    %v1770 = vrcp.pop %v1754
    %v1771 = vmul.f32 %v1754, %v1770
    %v1772 = vsub.f32 1.0, %v1771
    %v1773 = vmul.f32 %v1770, %v1772
    %v1774 = vadd.f32 %v1770, %v1773
    %vm1775 = vweird.f32 %v1754
    %vm1776 = vweird.f32 %v1770
    %vm1777 = vmor %vm1775, %vm1776
    %v1778 = vsel %vm1777, %v1770, %v1774
    %v1779 = vand.u32 2147483647, %v1754
    %vm1780 = vcmp.eq.f32.partialorder %v1779, 8.507059e+37
    %v1781 = vand.u32 %v1754, 2147483648
    %v1782 = vor.u32 1.1754944e-38, %v1781
    %v1783 = vsel %vm1780, %v1782, %v1778
    %v1784 = vmul.f32 1.0, %v1783
    %v1785 = vtanh.pop %v1746
    %v1786 = vmul.f32 %v1769, %v1706
    %1788 = vrot.lane.b32.xlu0 %v1785, 64
    %v1789 = vpop.permute.xlu0 %1788
    %v1791 = vmul.f32 %v1769, %v1789
    %1793 = vrot.lane.b32.xlu0 %v1791, 64
    %v1794 = vpop.permute.xlu0 %1793
    %v1796 = vadd.f32 %v1786, %v1794
    %v1797 = vtanh.pop %v1796
    %1799 = vrot.lane.b32.xlu0 %v1797, 64
    %v1800 = vpop.permute.xlu0 %1799
    %v1802 = vmul.f32 %v1784, %v1800
    %v1803 = vsel %vm58, %v1527, %v1525
    %v1804 = vsel %vm59, %v1528, %v1526
    %v1805 = vpack.c.bf16 %v1802, %v1802
    %v1807 = vsel %vm247, %v1805, 0
    %1809 = vmatpush.bf16.msra.mxu0 0
    %1810 = vmatpush.bf16.msra.mxu0 0
    %1811 = vmatpush.bf16.msra.mxu0 0
    %1812 = vmatpush.bf16.msra.mxu0 0
    %1813 = vmatpush.bf16.msra.mxu0 %v1337
    %1814 = vmatpush.bf16.msra.mxu0 %v1335
    %1815 = vmatpush.bf16.msra.mxu0 %v1333
    %1816 = vmatpush.bf16.msra.mxu0 %v1331
    %1817 = vmatmul.bf16.gmra.mxu0 %v1807
    %v1818 = vpop.f32.mrf.mxu0
    %v1819 = vadd.f32 0.0, %v1818
    %v1820 = vpop.f32.mrf.mxu0
    %1821 = vdwg.mxu0
    %1822 = vmatpush.bf16.msra.mxu0 0
    %1823 = vmatpush.bf16.msra.mxu0 0
    %1824 = vmatpush.bf16.msra.mxu0 0
    %1825 = vmatpush.bf16.msra.mxu0 0
    %1826 = vmatpush.bf16.msra.mxu0 %v1338
    %1827 = vmatpush.bf16.msra.mxu0 %v1336
    %1828 = vmatpush.bf16.msra.mxu0 %v1334
    %1829 = vmatpush.bf16.msra.mxu0 %v1332
    %1830 = vmatmul.bf16.gmra.mxu0 %v1807
    %v1831 = vpop.f32.mrf.mxu0
    %v1832 = vadd.f32 0.0, %v1831
    %v1833 = vpop.f32.mrf.mxu0
    %1834 = vdwg.mxu0
    %v1835 = vadd.f32 %v1803, %v1819
    %v1836 = vadd.f32 %v1804, %v1832
    %v1837 = vxor.u32 %v1835, 2147483648
    %v1838 = vxor.u32 %v1836, 2147483648
    %v1839 = vmul.f32 %v1837, 1.442695
    %v1840 = vpow.pop %v1839
    %v1841 = vmul.f32 %v1838, 1.442695
    %v1842 = vpow.pop %v1841
    %v1843 = vadd.f32 %v1840, 1.0
    %v1844 = vadd.f32 %v1842, 1.0
    %v1845 = vrcp.pop %v1843
    %v1846 = vmul.f32 %v1843, %v1845
    %v1847 = vsub.f32 1.0, %v1846
    %v1848 = vmul.f32 %v1845, %v1847
    %v1849 = vadd.f32 %v1845, %v1848
    %vm1850 = vweird.f32 %v1843
    %vm1851 = vweird.f32 %v1845
    %vm1852 = vmor %vm1850, %vm1851
    %v1853 = vsel %vm1852, %v1845, %v1849
    %v1854 = vand.u32 2147483647, %v1843
    %vm1855 = vcmp.eq.f32.partialorder %v1854, 8.507059e+37
    %v1856 = vand.u32 %v1843, 2147483648
    %v1857 = vor.u32 1.1754944e-38, %v1856
    %v1858 = vsel %vm1855, %v1857, %v1853
    %v1859 = vmul.f32 1.0, %v1858
    %v1860 = vrcp.pop %v1844
    %v1861 = vmul.f32 %v1844, %v1860
    %v1862 = vsub.f32 1.0, %v1861
    %v1863 = vmul.f32 %v1860, %v1862
    %v1864 = vadd.f32 %v1860, %v1863
    %vm1865 = vweird.f32 %v1844
    %vm1866 = vweird.f32 %v1860
    %vm1867 = vmor %vm1865, %vm1866
    %v1868 = vsel %vm1867, %v1860, %v1864
    %v1869 = vand.u32 2147483647, %v1844
    %vm1870 = vcmp.eq.f32.partialorder %v1869, 8.507059e+37
    %v1871 = vand.u32 %v1844, 2147483648
    %v1872 = vor.u32 1.1754944e-38, %v1871
    %v1873 = vsel %vm1870, %v1872, %v1868
    %v1874 = vmul.f32 1.0, %v1873
    %v1875 = vtanh.pop %v1836
    %v1876 = vmul.f32 %v1859, %v1796
    %1878 = vrot.lane.b32.xlu0 %v1875, 64
    %v1879 = vpop.permute.xlu0 %1878
    %v1881 = vmul.f32 %v1859, %v1879
    %1883 = vrot.lane.b32.xlu0 %v1881, 64
    %v1884 = vpop.permute.xlu0 %1883
    %v1886 = vadd.f32 %v1876, %v1884
    %v1887 = vtanh.pop %v1886
    %1889 = vrot.lane.b32.xlu0 %v1887, 64
    %v1890 = vpop.permute.xlu0 %1889
    %v1892 = vmul.f32 %v1874, %v1890
    %v1893 = vsel %vm58, %v1433, %v1431
    %v1894 = vsel %vm59, %v1434, %v1432
    %v1895 = vpack.c.bf16 %v1892, %v1892
    %v1897 = vsel %vm247, %v1895, 0
    %1899 = vmatpush.bf16.msra.mxu0 0
    %1900 = vmatpush.bf16.msra.mxu0 0
    %1901 = vmatpush.bf16.msra.mxu0 0
    %1902 = vmatpush.bf16.msra.mxu0 0
    %1903 = vmatpush.bf16.msra.mxu0 %v1337
    %1904 = vmatpush.bf16.msra.mxu0 %v1335
    %1905 = vmatpush.bf16.msra.mxu0 %v1333
    %1906 = vmatpush.bf16.msra.mxu0 %v1331
    %1907 = vmatmul.bf16.gmra.mxu0 %v1897
    %v1908 = vpop.f32.mrf.mxu0
    %v1909 = vadd.f32 0.0, %v1908
    %v1910 = vpop.f32.mrf.mxu0
    %1911 = vdwg.mxu0
    %1912 = vmatpush.bf16.msra.mxu0 0
    %1913 = vmatpush.bf16.msra.mxu0 0
    %1914 = vmatpush.bf16.msra.mxu0 0
    %1915 = vmatpush.bf16.msra.mxu0 0
    %1916 = vmatpush.bf16.msra.mxu0 %v1338
    %1917 = vmatpush.bf16.msra.mxu0 %v1336
    %1918 = vmatpush.bf16.msra.mxu0 %v1334
    %1919 = vmatpush.bf16.msra.mxu0 %v1332
    %1920 = vmatmul.bf16.gmra.mxu0 %v1897
    %v1921 = vpop.f32.mrf.mxu0
    %v1922 = vadd.f32 0.0, %v1921
    %v1923 = vpop.f32.mrf.mxu0
    %1924 = vdwg.mxu0
    %v1925 = vadd.f32 %v1893, %v1909
    %v1926 = vadd.f32 %v1894, %v1922
    %v1927 = vxor.u32 %v1925, 2147483648
    %v1928 = vxor.u32 %v1926, 2147483648
    %v1929 = vmul.f32 %v1927, 1.442695
    %v1930 = vpow.pop %v1929
    %v1931 = vmul.f32 %v1928, 1.442695
    %v1932 = vpow.pop %v1931
    %v1933 = vadd.f32 %v1930, 1.0
    %v1934 = vadd.f32 %v1932, 1.0
    %v1935 = vrcp.pop %v1933
    %v1936 = vmul.f32 %v1933, %v1935
    %v1937 = vsub.f32 1.0, %v1936
    %v1938 = vmul.f32 %v1935, %v1937
    %v1939 = vadd.f32 %v1935, %v1938
    %vm1940 = vweird.f32 %v1933
    %vm1941 = vweird.f32 %v1935
    %vm1942 = vmor %vm1940, %vm1941
    %v1943 = vsel %vm1942, %v1935, %v1939
    %v1944 = vand.u32 2147483647, %v1933
    %vm1945 = vcmp.eq.f32.partialorder %v1944, 8.507059e+37
    %v1946 = vand.u32 %v1933, 2147483648
    %v1947 = vor.u32 1.1754944e-38, %v1946
    %v1948 = vsel %vm1945, %v1947, %v1943
    %v1949 = vmul.f32 1.0, %v1948
    %v1950 = vrcp.pop %v1934
    %v1951 = vmul.f32 %v1934, %v1950
    %v1952 = vsub.f32 1.0, %v1951
    %v1953 = vmul.f32 %v1950, %v1952
    %v1954 = vadd.f32 %v1950, %v1953
    %vm1955 = vweird.f32 %v1934
    %vm1956 = vweird.f32 %v1950
    %vm1957 = vmor %vm1955, %vm1956
    %v1958 = vsel %vm1957, %v1950, %v1954
    %v1959 = vand.u32 2147483647, %v1934
    %vm1960 = vcmp.eq.f32.partialorder %v1959, 8.507059e+37
    %v1961 = vand.u32 %v1934, 2147483648
    %v1962 = vor.u32 1.1754944e-38, %v1961
    %v1963 = vsel %vm1960, %v1962, %v1958
    %v1964 = vmul.f32 1.0, %v1963
    %v1965 = vtanh.pop %v1926
    %v1966 = vmul.f32 %v1949, %v1886
    %1968 = vrot.lane.b32.xlu0 %v1965, 64
    %v1969 = vpop.permute.xlu0 %1968
    %v1971 = vmul.f32 %v1949, %v1969
    %1973 = vrot.lane.b32.xlu0 %v1971, 64
    %v1974 = vpop.permute.xlu0 %1973
    %v1976 = vadd.f32 %v1966, %v1974
    %v1977 = vtanh.pop %v1976
    %1979 = vrot.lane.b32.xlu0 %v1977, 64
    %v1980 = vpop.permute.xlu0 %1979
    %v1982 = vmul.f32 %v1964, %v1980
    %v1983 = vsel %vm58, %v1303, %v1301
    %v1984 = vsel %vm59, %v1304, %v1302
    %v1985 = vpack.c.bf16 %v1982, %v1982
    %v1987 = vsel %vm247, %v1985, 0
    %1989 = vmatpush.bf16.msra.mxu0 0
    %1990 = vmatpush.bf16.msra.mxu0 0
    %1991 = vmatpush.bf16.msra.mxu0 0
    %1992 = vmatpush.bf16.msra.mxu0 0
    %1993 = vmatpush.bf16.msra.mxu0 %v1337
    %1994 = vmatpush.bf16.msra.mxu0 %v1335
    %1995 = vmatpush.bf16.msra.mxu0 %v1333
    %1996 = vmatpush.bf16.msra.mxu0 %v1331
    %1997 = vmatmul.bf16.gmra.mxu0 %v1987
    %v1998 = vpop.f32.mrf.mxu0
    %v1999 = vadd.f32 0.0, %v1998
    %v2000 = vpop.f32.mrf.mxu0
    %2001 = vdwg.mxu0
    %2002 = vmatpush.bf16.msra.mxu0 0
    %2003 = vmatpush.bf16.msra.mxu0 0
    %2004 = vmatpush.bf16.msra.mxu0 0
    %2005 = vmatpush.bf16.msra.mxu0 0
    %2006 = vmatpush.bf16.msra.mxu0 %v1338
    %2007 = vmatpush.bf16.msra.mxu0 %v1336
    %2008 = vmatpush.bf16.msra.mxu0 %v1334
    %2009 = vmatpush.bf16.msra.mxu0 %v1332
    %2010 = vmatmul.bf16.gmra.mxu0 %v1987
    %v2011 = vpop.f32.mrf.mxu0
    %v2012 = vadd.f32 0.0, %v2011
    %v2013 = vpop.f32.mrf.mxu0
    %2014 = vdwg.mxu0
    %v2015 = vadd.f32 %v1983, %v1999
    %v2016 = vadd.f32 %v1984, %v2012
    %v2017 = vxor.u32 %v2015, 2147483648
    %v2018 = vxor.u32 %v2016, 2147483648
    %v2019 = vmul.f32 %v2017, 1.442695
    %v2020 = vpow.pop %v2019
    %v2021 = vmul.f32 %v2018, 1.442695
    %v2022 = vpow.pop %v2021
    %v2023 = vadd.f32 %v2020, 1.0
    %v2024 = vadd.f32 %v2022, 1.0
    %v2025 = vrcp.pop %v2023
    %v2026 = vmul.f32 %v2023, %v2025
    %v2027 = vsub.f32 1.0, %v2026
    %v2028 = vmul.f32 %v2025, %v2027
    %v2029 = vadd.f32 %v2025, %v2028
    %vm2030 = vweird.f32 %v2023
    %vm2031 = vweird.f32 %v2025
    %vm2032 = vmor %vm2030, %vm2031
    %v2033 = vsel %vm2032, %v2025, %v2029
    %v2034 = vand.u32 2147483647, %v2023
    %vm2035 = vcmp.eq.f32.partialorder %v2034, 8.507059e+37
    %v2036 = vand.u32 %v2023, 2147483648
    %v2037 = vor.u32 1.1754944e-38, %v2036
    %v2038 = vsel %vm2035, %v2037, %v2033
    %v2039 = vmul.f32 1.0, %v2038
    %v2040 = vrcp.pop %v2024
    %v2041 = vmul.f32 %v2024, %v2040
    %v2042 = vsub.f32 1.0, %v2041
    %v2043 = vmul.f32 %v2040, %v2042
    %v2044 = vadd.f32 %v2040, %v2043
    %vm2045 = vweird.f32 %v2024
    %vm2046 = vweird.f32 %v2040
    %vm2047 = vmor %vm2045, %vm2046
    %v2048 = vsel %vm2047, %v2040, %v2044
    %v2049 = vand.u32 2147483647, %v2024
    %vm2050 = vcmp.eq.f32.partialorder %v2049, 8.507059e+37
    %v2051 = vand.u32 %v2024, 2147483648
    %v2052 = vor.u32 1.1754944e-38, %v2051
    %v2053 = vsel %vm2050, %v2052, %v2048
    %v2054 = vmul.f32 1.0, %v2053
    %v2055 = vtanh.pop %v2016
    %v2056 = vmul.f32 %v2039, %v1976
    %2058 = vrot.lane.b32.xlu0 %v2055, 64
    %v2059 = vpop.permute.xlu0 %2058
    %v2061 = vmul.f32 %v2039, %v2059
    %2063 = vrot.lane.b32.xlu0 %v2061, 64
    %v2064 = vpop.permute.xlu0 %2063
    %v2066 = vadd.f32 %v2056, %v2064
    %v2067 = vtanh.pop %v2066
    %2069 = vrot.lane.b32.xlu0 %v2067, 64
    %v2070 = vpop.permute.xlu0 %2069
    %v2072 = vmul.f32 %v2054, %v2070
    %v2073 = vsel %vm335, %v2072, %v1430
    %v2074 = vld [vmem:[#allocation5 + $0xd0] sm:$0xf]
    %v2075 = vld [vmem:[#allocation5 + $0xd8] sm:$0xf]
    %v2076 = vld [vmem:[#allocation5 + $0xe0] sm:$0xf]
    %v2077 = vld [vmem:[#allocation5 + $0xe8] sm:$0xf]
    %v2078 = vld [vmem:[#allocation5 + $0xf0] sm:$0xf]
    %v2079 = vld [vmem:[#allocation5 + $0xf8] sm:$0xf]
    %v2080 = vld [vmem:[#allocation5 + $0x100] sm:$0xf]
    %v2081 = vld [vmem:[#allocation5 + $0x108] sm:$0xf]
    %v2082 = vld [vmem:[%s2 + $0x2] ss:$0 sm:$0xff]
    %v2083 = vpack.c.bf16 %v2073, %v2073
    %v2092 = vunpack.c.l.b16 %v2074
    %v2093 = vunpack.c.l.b16 %v2075
    %v2094 = vunpack.c.l.b16 %v2076
    %v2095 = vunpack.c.l.b16 %v2077
    %v2096 = vunpack.c.l.b16 %v2078
    %v2097 = vunpack.c.l.b16 %v2079
    %v2098 = vunpack.c.l.b16 %v2080
    %v2099 = vunpack.c.l.b16 %v2081
    %v2100 = vpack.c.b16 %v2093, %v2092
    %v2101 = vpack.c.b16 %v2095, %v2094
    %v2102 = vpack.c.b16 %v2097, %v2096
    %v2103 = vpack.c.b16 %v2099, %v2098
    %v2109 = vsel %vm247, %v2083, 0
    %2111 = vmatpush.bf16.msra.mxu0 0
    %2112 = vmatpush.bf16.msra.mxu0 0
    %2113 = vmatpush.bf16.msra.mxu0 0
    %2114 = vmatpush.bf16.msra.mxu0 0
    %2115 = vmatpush.bf16.msra.mxu0 %v2103
    %2116 = vmatpush.bf16.msra.mxu0 %v2102
    %2117 = vmatpush.bf16.msra.mxu0 %v2101
    %2118 = vmatpush.bf16.msra.mxu0 %v2100
    %2119 = vmatmul.bf16.gmra.mxu0 %v2109
    %v2120 = vpop.f32.mrf.mxu0
    %v2121 = vadd.f32 %v2082, %v2120
    %v2122 = vpop.f32.mrf.mxu0
    %2123 = vdwg.mxu0
    %v2124 = vmax.f32 %v2121, 0.0
    %v2125 = vld [vmem:[#allocation5 + $0x110] sm:$0xf]
    %v2126 = vld [vmem:[#allocation5 + $0x118] sm:$0xf]
    %v2127 = vld [vmem:[#allocation5 + $0x120] sm:$0xf]
    %v2128 = vld [vmem:[#allocation5 + $0x128] sm:$0xf]
    %v2129 = vld [vmem:[%s2 + $0x3] ss:$0 sm:$0xff]
    %v2130 = vpack.c.bf16 %v2124, %v2124
    %v2135 = vunpack.c.l.b16 %v2125
    %v2136 = vunpack.c.l.b16 %v2126
    %v2137 = vunpack.c.l.b16 %v2127
    %v2138 = vunpack.c.l.b16 %v2128
    %v2139 = vpack.c.b16 %v2136, %v2135
    %v2140 = vpack.c.b16 %v2138, %v2137
    %v2144 = vsel %vm335, %v2130, 0
    %2146 = vmatpush.bf16.msra.mxu0 0
    %2147 = vmatpush.bf16.msra.mxu0 0
    %2148 = vmatpush.bf16.msra.mxu0 0
    %2149 = vmatpush.bf16.msra.mxu0 0
    %2150 = vmatpush.bf16.msra.mxu0 0
    %2151 = vmatpush.bf16.msra.mxu0 0
    %2152 = vmatpush.bf16.msra.mxu0 %v2140
    %2153 = vmatpush.bf16.msra.mxu0 %v2139
    %2154 = vmatmul.bf16.gmra.mxu0 %v2144
    %v2155 = vpop.f32.mrf.mxu0
    %v2156 = vadd.f32 %v2129, %v2155
    %v2157 = vpop.f32.mrf.mxu0
    %2158 = vdwg.mxu0
    %v2159 = vmax.f32 %v2156, 0.0
    %v2160 = vld [vmem:[#allocation5 + $0x130] sm:$0xf]
    %v2161 = vld [vmem:[#allocation5 + $0x138] sm:$0xf]
    %v2162 = vld [vmem:[%s2 + $0x4] ss:$0 sm:$0xff]
    %v2163 = vpack.c.bf16 %v2159, %v2159
    %v2166 = vunpack.c.l.b16 %v2160
    %v2167 = vunpack.c.l.b16 %v2161
    %v2168 = vpack.c.b16 %v2167, %v2166
    %v2171 = vsel %vm106, %v2163, 0
    %2173 = vmatpush.bf16.msra.mxu0 0
    %2174 = vmatpush.bf16.msra.mxu0 0
    %2175 = vmatpush.bf16.msra.mxu0 0
    %2176 = vmatpush.bf16.msra.mxu0 0
    %2177 = vmatpush.bf16.msra.mxu0 0
    %2178 = vmatpush.bf16.msra.mxu0 0
    %2179 = vmatpush.bf16.msra.mxu0 0
    %2180 = vmatpush.bf16.msra.mxu0 %v2168
    %2181 = vmatmul.bf16.gmra.mxu0 %v2171
    %v2182 = vpop.f32.mrf.mxu0
    %v2183 = vadd.f32 %v2162, %v2182
    %v2184 = vpop.f32.mrf.mxu0
    %2185 = vdwg.mxu0
    %2186 = vst [vmem:[%s3] sm:$0xff] %v2183
    // Predicated region
    $region18: #{encoder_forward.1} parent=1 // pred_check
      _
    $region19: #{encoder_forward.1} parent=1 // pred_check_branch
      %2188 = sbr.rel (0) target = $region21
    $region20: #{encoder_forward.1} parent=1 // pred_region
      _
    $region21: #{encoder_forward.1} parent=1 // pred_fallthru
      _
    // Predicated region
    $region22: #{encoder_forward.1} parent=1 // pred_check
      _
    $region23: #{encoder_forward.1} parent=1 // pred_check_branch
      %2190 = sbr.rel (0) target = $region25
    $region24: #{encoder_forward.1} parent=1 // pred_region
      _
    $region25: #{encoder_forward.1} parent=1 // pred_fallthru
      _
    %2191 = vsyncpa [#allocation6], 1

</llo_original>
